<compile_context>
chip_gen: v5e
topology: v5e:2x2
jax: 0.10.0
libtpu: 0.0.40
codegen_flags: <defaults>
</compile_context>

<pallas_src>
import math

import jax
import jax.numpy as jnp
from jax.experimental import pallas as pl
from jax.experimental.pallas import tpu as pltpu

MU = 5000.0
LOG1P_MU = math.log(1.0 + MU)
INV_LOG1P_MU = 1.0 / LOG1P_MU


def _round_up(x, m):
    return -(-x // m) * m


def _percentile_topk(x, q):
    """np.percentile(..., q) with linear interpolation via lax.top_k (no full sort)."""
    xf = jnp.ravel(x).astype(jnp.float32)
    n = int(xf.shape[0])
    pos = (n - 1) * (float(q) / 100.0)
    lo_idx = int(math.floor(pos))
    frac = pos - lo_idx
    k = max(n - lo_idx, 1)                      # ascending a[lo_idx] == k-th largest
    top = jax.lax.top_k(xf, k)[0]               # descending
    lo = top[k - 1]
    if frac == 0.0 or k < 2:
        return lo
    hi = top[k - 2]                             # a[lo_idx + 1]
    return lo + frac * (hi - lo)


def _make_kernel(H, W, Ho, Wo, B, G, tail):
    def kernel(inv_norm_ref, nplanes_ref, pre_ref, gt_ref, out_ref,
               pad_pre_ref, pad_gt_ref, acc_ref):
        p_idx = pl.program_id(0)
        g_idx = pl.program_id(1)
        _, Ha, Wa = pad_pre_ref.shape

        @pl.when(g_idx == 0)
        def _init():
            acc_ref[p_idx] = jnp.zeros((Ho, Wo), jnp.float32)
            # Hygiene only: the region beyond [0:H+4, 0:W+4] never reaches the
            # cropped output, but keep it deterministic.
            pad_pre_ref[...] = jnp.zeros_like(pad_pre_ref)
            pad_gt_ref[...] = jnp.zeros_like(pad_gt_ref)

        inv_norm = inv_norm_ref[0]              # 1/percentile, hoisted reciprocal
        nplanes = nplanes_ref[0]                # number of real (N*C) planes
        base = (p_idx * G + g_idx) * B          # first logical plane of this block

        def tonemap(v):
            # norm_mu_tonemap; 2 EUP transcendentals per element, no divides.
            # TODO(synk): bf16 tanh/log would ~2x EUP throughput on v6e/v7x but
            # needs tolerance validation (and v5e has no bf16 EUP) -> kept f32.
            return jnp.log(1.0 + MU * jnp.tanh(v * inv_norm)) * INV_LOG1P_MU

        def build_reflect_pad(y, pad_ref):
            # 2-px reflect halo built in VMEM (replaces the HBM-side jnp.pad).
            pad_ref[:, 2:2 + H, 2:2 + W] = y
            # reflected columns (interior rows)
            pad_ref[:, 2:2 + H, 0:1] = y[:, :, 2:3]
            pad_ref[:, 2:2 + H, 1:2] = y[:, :, 1:2]
            pad_ref[:, 2:2 + H, W + 2:W + 3] = y[:, :, W - 2:W - 1]
            pad_ref[:, 2:2 + H, W + 3:W + 4] = y[:, :, W - 3:W - 2]
            # reflected rows copied from already-padded rows (corners reflect in both dims)
            pad_ref[:, 0:1, :] = pad_ref[:, 4:5, :]
            pad_ref[:, 1:2, :] = pad_ref[:, 3:4, :]
            pad_ref[:, H + 2:H + 3, :] = pad_ref[:, H:H + 1, :]
            pad_ref[:, H + 3:H + 4, :] = pad_ref[:, H - 1:H, :]

        def edge_abs_tanh(pad_ref):
            # |tanh(3x3 Laplacian)| as 9*center - 3x3 box (separable); taps via
            # pltpu.roll (XLU slot is idle here, so the stencil is free filler).
            v = pad_ref[...]                                   # (B, Ha, Wa)
            c1 = pltpu.roll(v, Wa - 1, 2)                      # v[., ., j+1]
            rs = v + c1 + pltpu.roll(v, Wa - 2, 2)             # row 3-tap at j
            bs = rs + pltpu.roll(rs, Ha - 1, 1) + pltpu.roll(rs, Ha - 2, 1)
            center = pltpu.roll(c1, Ha - 1, 1)                 # v[., i+1, j+1]
            lap = 9.0 * center - bs                            # 8*center - neighbors
            # Crop before the tanh so the EUP only works on the (Ho, Wo) region.
            return jnp.abs(jnp.tanh(lap[:, 0:Ho, 0:Wo]))

        build_reflect_pad(tonemap(pre_ref[...]), pad_pre_ref)
        build_reflect_pad(tonemap(gt_ref[...]), pad_gt_ref)
        d = jnp.abs(edge_abs_tanh(pad_pre_ref) - edge_abs_tanh(pad_gt_ref))  # (B, Ho, Wo)

        if tail:
            # Tail block(s) can contain planes past nplanes whose VMEM contents
            # are undefined.  A select (not a multiply) drops them, so any
            # NaN/Inf garbage that flowed through tanh/log cannot reach the
            # accumulator; valid planes are untouched.
            part = jnp.zeros((Ho, Wo), jnp.float32)
            for b in range(B):
                part = part + jnp.where(base + b < nplanes, d[b], 0.0)
        else:
            part = jnp.sum(d, axis=0)
        acc_ref[p_idx] = acc_ref[p_idx] + part

        @pl.when(g_idx == pl.num_programs(1) - 1)
        def _finalize():
            # TODO(synk): fold to an (8,128) tile with tile-aligned strided adds
            # instead of a full scalar reduce + broadcast (once per slot; negligible).
            total = jnp.sum(acc_ref[p_idx])
            out_ref[...] = jnp.full(out_ref.shape, total, dtype=out_ref.dtype)

    return kernel


def edge_loss(pre, gt, percentile=99.0, num_partials=1, max_plane_block=32,
              vmem_budget_bytes=44 * 1024 * 1024,
              vmem_limit_bytes=64 * 1024 * 1024):
    """pre, gt: (N, C, H, W) float (NCHW, like the PyTorch module).

    num_partials: 1 on single-TensorCore parts (v5e/v6e), 2 on v7x to shard the
    leading "parallel" grid axis across both TensorCores.
    vmem_limit_bytes: 64 MiB is safe on every generation; can be raised toward
    ~96 MiB on v5e/v6e (128 MiB physical VMEM).
    """
    pre = pre.astype(jnp.float32)
    gt = gt.astype(jnp.float32)
    N, C, H, W = pre.shape
    NC = N * C
    Hp, Wp = H + 4, W + 4
    Ho, Wo = H + 2, W + 2
    Ha, Wa = _round_up(Hp, 8), _round_up(Wp, 128)   # aligned halo scratch dims

    # 99th percentile via top-k of the top ~1% (no global sort).
    norm_perc = _percentile_topk(gt, percentile)
    # Matches the PyTorch module exactly: divide by the raw percentile, no clamp.
    inv_norm = (1.0 / norm_perc).astype(jnp.float32)

    P = max(1, int(num_partials))
    # VMEM-budget-driven plane block: 2 inputs x 2 pipeline buffers of (H, W)
    # + 2 halo scratches + ~6 live block-sized temporaries of (Ha, Wa) per plane,
    # plus the (P, Ho, Wo) partial-sum accumulator.
    per_plane_bytes = 16 * H * W + 32 * Ha * Wa
    avail = vmem_budget_bytes - 4 * P * Ho * Wo
    B = int(max(1, min(NC, int(max_plane_block), avail // per_plane_bytes)))
    # TODO(synk): for very large frames (1080p on v7x's 64 MiB VMEM) even one
    # plane does not fit; W-axis tiles with a 2-px halo (overlapping/element
    # index_map) are needed there.
    G = -(-NC // (P * B))                   # sequential steps per partial slot
    tail = (P * G * B != NC)                # any block partially/fully past NC?
    last_blk = -(-NC // B) - 1              # last block index holding real planes

    pre_pl = pre.reshape(NC, H, W)          # row-major collapse: no HBM copy
    gt_pl = gt.reshape(NC, H, W)

    kernel = _make_kernel(H, W, Ho, Wo, B, G, tail)
    # Clamp fully-out-of-range block indices so the DMA stays in bounds; those
    # slots contribute nothing because the in-kernel mask uses the unclamped base.
    plane_map = lambda p, g: (jnp.minimum(p * G + g, last_blk), 0, 0)

    out = pl.pallas_call(
        kernel,
        out_shape=jax.ShapeDtypeStruct((P, 8, 128), jnp.float32),
        grid=(P, G),
        in_specs=[
            pl.BlockSpec(memory_space=pltpu.MemorySpace.SMEM),   # inv_norm (1,) f32
            pl.BlockSpec(memory_space=pltpu.MemorySpace.SMEM),   # nplanes  (1,) i32
            pl.BlockSpec((B, H, W), plane_map),                  # pre planes
            pl.BlockSpec((B, H, W), plane_map),                  # gt planes
        ],
        out_specs=pl.BlockSpec((1, 8, 128), lambda p, g: (p, 0, 0)),
        scratch_shapes=[
            pltpu.VMEM((B, Ha, Wa), jnp.float32),                # pre halo scratch
            pltpu.VMEM((B, Ha, Wa), jnp.float32),                # gt halo scratch
            pltpu.VMEM((P, Ho, Wo), jnp.float32),                # per-slot (h,w) partials
        ],
        compiler_params=pltpu.CompilerParams(
            dimension_semantics=("parallel", "arbitrary"),
            vmem_limit_bytes=int(vmem_limit_bytes),
        ),
    )(jnp.reshape(inv_norm, (1,)),
      jnp.full((1,), NC, dtype=jnp.int32),
      pre_pl, gt_pl)

    count = float(NC * Ho * Wo)             # L1Loss mean denominator
    return jnp.sum(out[:, 0, 0]) / count


def _edge_loss_ref(pre, gt, percentile=99.0):
    """Pure-JAX reference mirroring the PyTorch forward."""
    norm_perc = jnp.percentile(gt.astype(jnp.float32), percentile)

    def tonemap(x):
        return jnp.log(1.0 + MU * jnp.tanh(x / norm_perc)) / LOG1P_MU

    def lap_abs_tanh(x):
        xp = jnp.pad(x, ((0, 0), (0, 0), (2, 2), (2, 2)), mode='reflect')
        Ho, Wo = xp.shape[2] - 2, xp.shape[3] - 2
        c = 8.0 * xp[:, :, 1:1 + Ho, 1:1 + Wo]
        n = (xp[:, :, 0:Ho, 0:Wo] + xp[:, :, 0:Ho, 1:1 + Wo] + xp[:, :, 0:Ho, 2:2 + Wo]
             + xp[:, :, 1:1 + Ho, 0:Wo] + xp[:, :, 1:1 + Ho, 2:2 + Wo]
             + xp[:, :, 2:2 + Ho, 0:Wo] + xp[:, :, 2:2 + Ho, 1:1 + Wo]
             + xp[:, :, 2:2 + Ho, 2:2 + Wo])
        return jnp.abs(jnp.tanh(c - n))

    return jnp.mean(jnp.abs(lap_abs_tanh(tonemap(pre)) - lap_abs_tanh(tonemap(gt))))


if __name__ == "__main__":
    key = jax.random.PRNGKey(0)
    k1, k2 = jax.random.split(key)
    N, C, H, W = 2, 3, 16, 16               # channels=3 as in the module __init__
    pre = jax.random.uniform(k1, (N, C, H, W), dtype=jnp.float32)
    gt = jax.random.uniform(k2, (N, C, H, W), dtype=jnp.float32)

    ref = _edge_loss_ref(pre, gt)

    # 1) single whole-problem block (no tail, one grid step)
    loss = edge_loss(pre, gt)
    jax.block_until_ready(loss)
    assert jnp.allclose(loss, ref, rtol=1e-4, atol=1e-5), (loss, ref)

    # 2) multi-step grid with a partial tail block (exercises in-kernel tail masking)
    loss_tail = edge_loss(pre, gt, max_plane_block=4)
    jax.block_until_ready(loss_tail)
    assert jnp.allclose(loss_tail, ref, rtol=1e-4, atol=1e-5), (loss_tail, ref)

    # 3) two partial-sum slots (v7x-style 2-TensorCore sharding of the plane axis)
    loss_p2 = edge_loss(pre, gt, num_partials=2, max_plane_block=2)
    jax.block_until_ready(loss_p2)
    assert jnp.allclose(loss_p2, ref, rtol=1e-4, atol=1e-5), (loss_p2, ref)

    print("KERNEL_OK")
</pallas_src>

<mosaic_0001>
module attributes {stable_mosaic.version = 11 : i64} {
  func.func @kernel(%arg0: i32, %arg1: i32, %arg2: memref<1xf32, #tpu.memory_space<smem>>, %arg3: memref<1xi32, #tpu.memory_space<smem>>, %arg4: memref<6x16x16xf32, #tpu.memory_space<vmem>>, %arg5: memref<6x16x16xf32, #tpu.memory_space<vmem>>, %arg6: memref<1x8x128xf32, #tpu.memory_space<vmem>>, %arg7: memref<6x24x128xf32, #tpu.memory_space<vmem>>, %arg8: memref<6x24x128xf32, #tpu.memory_space<vmem>>, %arg9: memref<1x18x18xf32, #tpu.memory_space<vmem>>) attributes {dimension_semantics = [#tpu.dimension_semantics<parallel>, #tpu.dimension_semantics<arbitrary>], iteration_bounds = array<i64: 1, 1>, scalar_prefetch = 0 : i64, scratch_operands = 3 : i64, tpu.core_type = #tpu.core_type<tc>, window_params = [{transform_indices = @transform_0, window_bounds = array<i64: 1>}, {transform_indices = @transform_1, window_bounds = array<i64: 1>}, {transform_indices = @transform_2, window_bounds = array<i64: 6, 16, 16>}, {transform_indices = @transform_3, window_bounds = array<i64: 6, 16, 16>}, {transform_indices = @transform_4, window_bounds = array<i64: 1, 8, 128>}]} {
    %c0_i32 = arith.constant 0 : i32
    %0 = arith.cmpi eq, %arg1, %c0_i32 : i32
    %1 = arith.extui %0 : i1 to i32
    %c0_i32_0 = arith.constant 0 : i32
    %2 = arith.cmpi ne, %1, %c0_i32_0 : i32
    scf.if %2 {
      %cst_103 = arith.constant 0.000000e+00 : f32
      %106 = vector.broadcast %cst_103 : f32 to vector<18x18xf32>
      %107 = arith.index_cast %arg0 : i32 to index
      %c0_104 = arith.constant 0 : index
      %c0_105 = arith.constant 0 : index
      %108 = vector.load %arg9[%107, %c0_104, %c0_105] : memref<1x18x18xf32, #tpu.memory_space<vmem>>, vector<1x18x18xf32>
      %109 = vector.shape_cast %108 : vector<1x18x18xf32> to vector<18x18xf32>
      %110 = vector.shape_cast %106 : vector<18x18xf32> to vector<1x18x18xf32>
      tpu.vector_store %arg9[%107, %c0_104, %c0_105], %110 {strides = array<i32>} : memref<1x18x18xf32, #tpu.memory_space<vmem>>, vector<1x18x18xf32>,
      %cst_106 = arith.constant 0.000000e+00 : f32
      %111 = vector.broadcast %cst_106 : f32 to vector<6x24x128xf32>
      %c0_107 = arith.constant 0 : index
      %c0_108 = arith.constant 0 : index
      %c0_109 = arith.constant 0 : index
      %112 = vector.load %arg7[%c0_107, %c0_108, %c0_109] : memref<6x24x128xf32, #tpu.memory_space<vmem>>, vector<6x24x128xf32>
      tpu.vector_store %arg7[%c0_107, %c0_108, %c0_109], %111 {strides = array<i32>} : memref<6x24x128xf32, #tpu.memory_space<vmem>>, vector<6x24x128xf32>,
      %cst_110 = arith.constant 0.000000e+00 : f32
      %113 = vector.broadcast %cst_110 : f32 to vector<6x24x128xf32>
      %c0_111 = arith.constant 0 : index
      %c0_112 = arith.constant 0 : index
      %c0_113 = arith.constant 0 : index
      %114 = vector.load %arg8[%c0_111, %c0_112, %c0_113] : memref<6x24x128xf32, #tpu.memory_space<vmem>>, vector<6x24x128xf32>
      tpu.vector_store %arg8[%c0_111, %c0_112, %c0_113], %113 {strides = array<i32>} : memref<6x24x128xf32, #tpu.memory_space<vmem>>, vector<6x24x128xf32>,
    } else {
    }
    %c0 = arith.constant 0 : index
    %3 = memref.load %arg2[%c0] : memref<1xf32, #tpu.memory_space<smem>>
    %c0_1 = arith.constant 0 : index
    %c0_2 = arith.constant 0 : index
    %c0_3 = arith.constant 0 : index
    %4 = vector.load %arg4[%c0_1, %c0_2, %c0_3] : memref<6x16x16xf32, #tpu.memory_space<vmem>>, vector<6x16x16xf32>
    %5 = vector.broadcast %3 : f32 to vector<6x16x16xf32>
    %6 = arith.mulf %4, %5 : vector<6x16x16xf32>
    %7 = math.tanh %6 : vector<6x16x16xf32>
    %cst = arith.constant 5.000000e+03 : f32
    %8 = vector.broadcast %cst : f32 to vector<6x16x16xf32>
    %9 = arith.mulf %8, %7 : vector<6x16x16xf32>
    %cst_4 = arith.constant 1.000000e+00 : f32
    %10 = vector.broadcast %cst_4 : f32 to vector<6x16x16xf32>
    %11 = arith.addf %10, %9 : vector<6x16x16xf32>
    %12 = math.log %11 : vector<6x16x16xf32>
    %cst_5 = arith.constant 0.117406815 : f32
    %13 = vector.broadcast %cst_5 : f32 to vector<6x16x16xf32>
    %14 = arith.mulf %12, %13 : vector<6x16x16xf32>
    %c0_6 = arith.constant 0 : index
    %c2 = arith.constant 2 : index
    %c2_7 = arith.constant 2 : index
    %15 = vector.load %arg7[%c0_6, %c2, %c2_7] : memref<6x24x128xf32, #tpu.memory_space<vmem>>, vector<6x16x16xf32>
    tpu.vector_store %arg7[%c0_6, %c2, %c2_7], %14 {strides = array<i32>} : memref<6x24x128xf32, #tpu.memory_space<vmem>>, vector<6x16x16xf32>,
    %16 = vector.extract_strided_slice %14 {offsets = [0, 0, 2], sizes = [6, 16, 1], strides = [1, 1, 1]} : vector<6x16x16xf32> to vector<6x16x1xf32>
    %c0_8 = arith.constant 0 : index
    %c2_9 = arith.constant 2 : index
    %c0_10 = arith.constant 0 : index
    %17 = vector.load %arg7[%c0_8, %c2_9, %c0_10] : memref<6x24x128xf32, #tpu.memory_space<vmem>>, vector<6x16x1xf32>
    tpu.vector_store %arg7[%c0_8, %c2_9, %c0_10], %16 {strides = array<i32>} : memref<6x24x128xf32, #tpu.memory_space<vmem>>, vector<6x16x1xf32>,
    %18 = vector.extract_strided_slice %14 {offsets = [0, 0, 1], sizes = [6, 16, 1], strides = [1, 1, 1]} : vector<6x16x16xf32> to vector<6x16x1xf32>
    %c0_11 = arith.constant 0 : index
    %c2_12 = arith.constant 2 : index
    %c1 = arith.constant 1 : index
    %19 = vector.load %arg7[%c0_11, %c2_12, %c1] : memref<6x24x128xf32, #tpu.memory_space<vmem>>, vector<6x16x1xf32>
    tpu.vector_store %arg7[%c0_11, %c2_12, %c1], %18 {strides = array<i32>} : memref<6x24x128xf32, #tpu.memory_space<vmem>>, vector<6x16x1xf32>,
    %20 = vector.extract_strided_slice %14 {offsets = [0, 0, 14], sizes = [6, 16, 1], strides = [1, 1, 1]} : vector<6x16x16xf32> to vector<6x16x1xf32>
    %c0_13 = arith.constant 0 : index
    %c2_14 = arith.constant 2 : index
    %c18 = arith.constant 18 : index
    %21 = vector.load %arg7[%c0_13, %c2_14, %c18] : memref<6x24x128xf32, #tpu.memory_space<vmem>>, vector<6x16x1xf32>
    tpu.vector_store %arg7[%c0_13, %c2_14, %c18], %20 {strides = array<i32>} : memref<6x24x128xf32, #tpu.memory_space<vmem>>, vector<6x16x1xf32>,
    %22 = vector.extract_strided_slice %14 {offsets = [0, 0, 13], sizes = [6, 16, 1], strides = [1, 1, 1]} : vector<6x16x16xf32> to vector<6x16x1xf32>
    %c0_15 = arith.constant 0 : index
    %c2_16 = arith.constant 2 : index
    %c19 = arith.constant 19 : index
    %23 = vector.load %arg7[%c0_15, %c2_16, %c19] : memref<6x24x128xf32, #tpu.memory_space<vmem>>, vector<6x16x1xf32>
    tpu.vector_store %arg7[%c0_15, %c2_16, %c19], %22 {strides = array<i32>} : memref<6x24x128xf32, #tpu.memory_space<vmem>>, vector<6x16x1xf32>,
    %c0_17 = arith.constant 0 : index
    %c4 = arith.constant 4 : index
    %c0_18 = arith.constant 0 : index
    %24 = vector.load %arg7[%c0_17, %c4, %c0_18] : memref<6x24x128xf32, #tpu.memory_space<vmem>>, vector<6x1x128xf32>
    %c0_19 = arith.constant 0 : index
    %c0_20 = arith.constant 0 : index
    %c0_21 = arith.constant 0 : index
    %25 = vector.load %arg7[%c0_19, %c0_20, %c0_21] : memref<6x24x128xf32, #tpu.memory_space<vmem>>, vector<6x1x128xf32>
    tpu.vector_store %arg7[%c0_19, %c0_20, %c0_21], %24 {strides = array<i32>} : memref<6x24x128xf32, #tpu.memory_space<vmem>>, vector<6x1x128xf32>,
    %c0_22 = arith.constant 0 : index
    %c3 = arith.constant 3 : index
    %c0_23 = arith.constant 0 : index
    %26 = vector.load %arg7[%c0_22, %c3, %c0_23] : memref<6x24x128xf32, #tpu.memory_space<vmem>>, vector<6x1x128xf32>
    %c0_24 = arith.constant 0 : index
    %c1_25 = arith.constant 1 : index
    %c0_26 = arith.constant 0 : index
    %27 = vector.load %arg7[%c0_24, %c1_25, %c0_26] : memref<6x24x128xf32, #tpu.memory_space<vmem>>, vector<6x1x128xf32>
    tpu.vector_store %arg7[%c0_24, %c1_25, %c0_26], %26 {strides = array<i32>} : memref<6x24x128xf32, #tpu.memory_space<vmem>>, vector<6x1x128xf32>,
    %c0_27 = arith.constant 0 : index
    %c16 = arith.constant 16 : index
    %c0_28 = arith.constant 0 : index
    %28 = vector.load %arg7[%c0_27, %c16, %c0_28] : memref<6x24x128xf32, #tpu.memory_space<vmem>>, vector<6x1x128xf32>
    %c0_29 = arith.constant 0 : index
    %c18_30 = arith.constant 18 : index
    %c0_31 = arith.constant 0 : index
    %29 = vector.load %arg7[%c0_29, %c18_30, %c0_31] : memref<6x24x128xf32, #tpu.memory_space<vmem>>, vector<6x1x128xf32>
    tpu.vector_store %arg7[%c0_29, %c18_30, %c0_31], %28 {strides = array<i32>} : memref<6x24x128xf32, #tpu.memory_space<vmem>>, vector<6x1x128xf32>,
    %c0_32 = arith.constant 0 : index
    %c15 = arith.constant 15 : index
    %c0_33 = arith.constant 0 : index
    %30 = vector.load %arg7[%c0_32, %c15, %c0_33] : memref<6x24x128xf32, #tpu.memory_space<vmem>>, vector<6x1x128xf32>
    %c0_34 = arith.constant 0 : index
    %c19_35 = arith.constant 19 : index
    %c0_36 = arith.constant 0 : index
    %31 = vector.load %arg7[%c0_34, %c19_35, %c0_36] : memref<6x24x128xf32, #tpu.memory_space<vmem>>, vector<6x1x128xf32>
    tpu.vector_store %arg7[%c0_34, %c19_35, %c0_36], %30 {strides = array<i32>} : memref<6x24x128xf32, #tpu.memory_space<vmem>>, vector<6x1x128xf32>,
    %c0_37 = arith.constant 0 : index
    %c0_38 = arith.constant 0 : index
    %c0_39 = arith.constant 0 : index
    %32 = vector.load %arg5[%c0_37, %c0_38, %c0_39] : memref<6x16x16xf32, #tpu.memory_space<vmem>>, vector<6x16x16xf32>
    %33 = vector.broadcast %3 : f32 to vector<6x16x16xf32>
    %34 = arith.mulf %32, %33 : vector<6x16x16xf32>
    %35 = math.tanh %34 : vector<6x16x16xf32>
    %cst_40 = arith.constant 5.000000e+03 : f32
    %36 = vector.broadcast %cst_40 : f32 to vector<6x16x16xf32>
    %37 = arith.mulf %36, %35 : vector<6x16x16xf32>
    %cst_41 = arith.constant 1.000000e+00 : f32
    %38 = vector.broadcast %cst_41 : f32 to vector<6x16x16xf32>
    %39 = arith.addf %38, %37 : vector<6x16x16xf32>
    %40 = math.log %39 : vector<6x16x16xf32>
    %cst_42 = arith.constant 0.117406815 : f32
    %41 = vector.broadcast %cst_42 : f32 to vector<6x16x16xf32>
    %42 = arith.mulf %40, %41 : vector<6x16x16xf32>
    %c0_43 = arith.constant 0 : index
    %c2_44 = arith.constant 2 : index
    %c2_45 = arith.constant 2 : index
    %43 = vector.load %arg8[%c0_43, %c2_44, %c2_45] : memref<6x24x128xf32, #tpu.memory_space<vmem>>, vector<6x16x16xf32>
    tpu.vector_store %arg8[%c0_43, %c2_44, %c2_45], %42 {strides = array<i32>} : memref<6x24x128xf32, #tpu.memory_space<vmem>>, vector<6x16x16xf32>,
    %44 = vector.extract_strided_slice %42 {offsets = [0, 0, 2], sizes = [6, 16, 1], strides = [1, 1, 1]} : vector<6x16x16xf32> to vector<6x16x1xf32>
    %c0_46 = arith.constant 0 : index
    %c2_47 = arith.constant 2 : index
    %c0_48 = arith.constant 0 : index
    %45 = vector.load %arg8[%c0_46, %c2_47, %c0_48] : memref<6x24x128xf32, #tpu.memory_space<vmem>>, vector<6x16x1xf32>
    tpu.vector_store %arg8[%c0_46, %c2_47, %c0_48], %44 {strides = array<i32>} : memref<6x24x128xf32, #tpu.memory_space<vmem>>, vector<6x16x1xf32>,
    %46 = vector.extract_strided_slice %42 {offsets = [0, 0, 1], sizes = [6, 16, 1], strides = [1, 1, 1]} : vector<6x16x16xf32> to vector<6x16x1xf32>
    %c0_49 = arith.constant 0 : index
    %c2_50 = arith.constant 2 : index
    %c1_51 = arith.constant 1 : index
    %47 = vector.load %arg8[%c0_49, %c2_50, %c1_51] : memref<6x24x128xf32, #tpu.memory_space<vmem>>, vector<6x16x1xf32>
    tpu.vector_store %arg8[%c0_49, %c2_50, %c1_51], %46 {strides = array<i32>} : memref<6x24x128xf32, #tpu.memory_space<vmem>>, vector<6x16x1xf32>,
    %48 = vector.extract_strided_slice %42 {offsets = [0, 0, 14], sizes = [6, 16, 1], strides = [1, 1, 1]} : vector<6x16x16xf32> to vector<6x16x1xf32>
    %c0_52 = arith.constant 0 : index
    %c2_53 = arith.constant 2 : index
    %c18_54 = arith.constant 18 : index
    %49 = vector.load %arg8[%c0_52, %c2_53, %c18_54] : memref<6x24x128xf32, #tpu.memory_space<vmem>>, vector<6x16x1xf32>
    tpu.vector_store %arg8[%c0_52, %c2_53, %c18_54], %48 {strides = array<i32>} : memref<6x24x128xf32, #tpu.memory_space<vmem>>, vector<6x16x1xf32>,
    %50 = vector.extract_strided_slice %42 {offsets = [0, 0, 13], sizes = [6, 16, 1], strides = [1, 1, 1]} : vector<6x16x16xf32> to vector<6x16x1xf32>
    %c0_55 = arith.constant 0 : index
    %c2_56 = arith.constant 2 : index
    %c19_57 = arith.constant 19 : index
    %51 = vector.load %arg8[%c0_55, %c2_56, %c19_57] : memref<6x24x128xf32, #tpu.memory_space<vmem>>, vector<6x16x1xf32>
    tpu.vector_store %arg8[%c0_55, %c2_56, %c19_57], %50 {strides = array<i32>} : memref<6x24x128xf32, #tpu.memory_space<vmem>>, vector<6x16x1xf32>,
    %c0_58 = arith.constant 0 : index
    %c4_59 = arith.constant 4 : index
    %c0_60 = arith.constant 0 : index
    %52 = vector.load %arg8[%c0_58, %c4_59, %c0_60] : memref<6x24x128xf32, #tpu.memory_space<vmem>>, vector<6x1x128xf32>
    %c0_61 = arith.constant 0 : index
    %c0_62 = arith.constant 0 : index
    %c0_63 = arith.constant 0 : index
    %53 = vector.load %arg8[%c0_61, %c0_62, %c0_63] : memref<6x24x128xf32, #tpu.memory_space<vmem>>, vector<6x1x128xf32>
    tpu.vector_store %arg8[%c0_61, %c0_62, %c0_63], %52 {strides = array<i32>} : memref<6x24x128xf32, #tpu.memory_space<vmem>>, vector<6x1x128xf32>,
    %c0_64 = arith.constant 0 : index
    %c3_65 = arith.constant 3 : index
    %c0_66 = arith.constant 0 : index
    %54 = vector.load %arg8[%c0_64, %c3_65, %c0_66] : memref<6x24x128xf32, #tpu.memory_space<vmem>>, vector<6x1x128xf32>
    %c0_67 = arith.constant 0 : index
    %c1_68 = arith.constant 1 : index
    %c0_69 = arith.constant 0 : index
    %55 = vector.load %arg8[%c0_67, %c1_68, %c0_69] : memref<6x24x128xf32, #tpu.memory_space<vmem>>, vector<6x1x128xf32>
    tpu.vector_store %arg8[%c0_67, %c1_68, %c0_69], %54 {strides = array<i32>} : memref<6x24x128xf32, #tpu.memory_space<vmem>>, vector<6x1x128xf32>,
    %c0_70 = arith.constant 0 : index
    %c16_71 = arith.constant 16 : index
    %c0_72 = arith.constant 0 : index
    %56 = vector.load %arg8[%c0_70, %c16_71, %c0_72] : memref<6x24x128xf32, #tpu.memory_space<vmem>>, vector<6x1x128xf32>
    %c0_73 = arith.constant 0 : index
    %c18_74 = arith.constant 18 : index
    %c0_75 = arith.constant 0 : index
    %57 = vector.load %arg8[%c0_73, %c18_74, %c0_75] : memref<6x24x128xf32, #tpu.memory_space<vmem>>, vector<6x1x128xf32>
    tpu.vector_store %arg8[%c0_73, %c18_74, %c0_75], %56 {strides = array<i32>} : memref<6x24x128xf32, #tpu.memory_space<vmem>>, vector<6x1x128xf32>,
    %c0_76 = arith.constant 0 : index
    %c15_77 = arith.constant 15 : index
    %c0_78 = arith.constant 0 : index
    %58 = vector.load %arg8[%c0_76, %c15_77, %c0_78] : memref<6x24x128xf32, #tpu.memory_space<vmem>>, vector<6x1x128xf32>
    %c0_79 = arith.constant 0 : index
    %c19_80 = arith.constant 19 : index
    %c0_81 = arith.constant 0 : index
    %59 = vector.load %arg8[%c0_79, %c19_80, %c0_81] : memref<6x24x128xf32, #tpu.memory_space<vmem>>, vector<6x1x128xf32>
    tpu.vector_store %arg8[%c0_79, %c19_80, %c0_81], %58 {strides = array<i32>} : memref<6x24x128xf32, #tpu.memory_space<vmem>>, vector<6x1x128xf32>,
    %c0_82 = arith.constant 0 : index
    %c0_83 = arith.constant 0 : index
    %c0_84 = arith.constant 0 : index
    %60 = vector.load %arg7[%c0_82, %c0_83, %c0_84] : memref<6x24x128xf32, #tpu.memory_space<vmem>>, vector<6x24x128xf32>
    %c127_i32 = arith.constant 127 : i32
    %61 = tpu.dynamic_rotate %60 by %c127_i32 dim 2 : vector<6x24x128xf32>, i32 -> vector<6x24x128xf32>
    %62 = arith.addf %60, %61 : vector<6x24x128xf32>
    %c126_i32 = arith.constant 126 : i32
    %63 = tpu.dynamic_rotate %60 by %c126_i32 dim 2 : vector<6x24x128xf32>, i32 -> vector<6x24x128xf32>
    %64 = arith.addf %62, %63 : vector<6x24x128xf32>
    %c23_i32 = arith.constant 23 : i32
    %65 = tpu.dynamic_rotate %64 by %c23_i32 dim 1 : vector<6x24x128xf32>, i32 -> vector<6x24x128xf32>
    %66 = arith.addf %64, %65 : vector<6x24x128xf32>
    %c22_i32 = arith.constant 22 : i32
    %67 = tpu.dynamic_rotate %64 by %c22_i32 dim 1 : vector<6x24x128xf32>, i32 -> vector<6x24x128xf32>
    %68 = arith.addf %66, %67 : vector<6x24x128xf32>
    %c23_i32_85 = arith.constant 23 : i32
    %69 = tpu.dynamic_rotate %61 by %c23_i32_85 dim 1 : vector<6x24x128xf32>, i32 -> vector<6x24x128xf32>
    %cst_86 = arith.constant 9.000000e+00 : f32
    %70 = vector.broadcast %cst_86 : f32 to vector<6x24x128xf32>
    %71 = arith.mulf %70, %69 : vector<6x24x128xf32>
    %72 = arith.subf %71, %68 : vector<6x24x128xf32>
    %73 = vector.extract_strided_slice %72 {offsets = [0, 0, 0], sizes = [6, 18, 18], strides = [1, 1, 1]} : vector<6x24x128xf32> to vector<6x18x18xf32>
    %74 = math.tanh %73 : vector<6x18x18xf32>
    %75 = math.absf %74 : vector<6x18x18xf32>
    %c0_87 = arith.constant 0 : index
    %c0_88 = arith.constant 0 : index
    %c0_89 = arith.constant 0 : index
    %76 = vector.load %arg8[%c0_87, %c0_88, %c0_89] : memref<6x24x128xf32, #tpu.memory_space<vmem>>, vector<6x24x128xf32>
    %c127_i32_90 = arith.constant 127 : i32
    %77 = tpu.dynamic_rotate %76 by %c127_i32_90 dim 2 : vector<6x24x128xf32>, i32 -> vector<6x24x128xf32>
    %78 = arith.addf %76, %77 : vector<6x24x128xf32>
    %c126_i32_91 = arith.constant 126 : i32
    %79 = tpu.dynamic_rotate %76 by %c126_i32_91 dim 2 : vector<6x24x128xf32>, i32 -> vector<6x24x128xf32>
    %80 = arith.addf %78, %79 : vector<6x24x128xf32>
    %c23_i32_92 = arith.constant 23 : i32
    %81 = tpu.dynamic_rotate %80 by %c23_i32_92 dim 1 : vector<6x24x128xf32>, i32 -> vector<6x24x128xf32>
    %82 = arith.addf %80, %81 : vector<6x24x128xf32>
    %c22_i32_93 = arith.constant 22 : i32
    %83 = tpu.dynamic_rotate %80 by %c22_i32_93 dim 1 : vector<6x24x128xf32>, i32 -> vector<6x24x128xf32>
    %84 = arith.addf %82, %83 : vector<6x24x128xf32>
    %c23_i32_94 = arith.constant 23 : i32
    %85 = tpu.dynamic_rotate %77 by %c23_i32_94 dim 1 : vector<6x24x128xf32>, i32 -> vector<6x24x128xf32>
    %cst_95 = arith.constant 9.000000e+00 : f32
    %86 = vector.broadcast %cst_95 : f32 to vector<6x24x128xf32>
    %87 = arith.mulf %86, %85 : vector<6x24x128xf32>
    %88 = arith.subf %87, %84 : vector<6x24x128xf32>
    %89 = vector.extract_strided_slice %88 {offsets = [0, 0, 0], sizes = [6, 18, 18], strides = [1, 1, 1]} : vector<6x24x128xf32> to vector<6x18x18xf32>
    %90 = math.tanh %89 : vector<6x18x18xf32>
    %91 = math.absf %90 : vector<6x18x18xf32>
    %92 = arith.subf %75, %91 : vector<6x18x18xf32>
    %93 = math.absf %92 : vector<6x18x18xf32>
    %cst_96 = arith.constant dense<0.000000e+00> : vector<18x18xf32>
    %94 = vector.multi_reduction <add>, %93, %cst_96 [0] : vector<6x18x18xf32> to vector<18x18xf32>
    %95 = arith.index_cast %arg0 : i32 to index
    %c0_97 = arith.constant 0 : index
    %c0_98 = arith.constant 0 : index
    %96 = vector.load %arg9[%95, %c0_97, %c0_98] : memref<1x18x18xf32, #tpu.memory_space<vmem>>, vector<1x18x18xf32>
    %97 = vector.shape_cast %96 : vector<1x18x18xf32> to vector<18x18xf32>
    %98 = arith.addf %97, %94 : vector<18x18xf32>
    %99 = arith.index_cast %arg0 : i32 to index
    %c0_99 = arith.constant 0 : index
    %c0_100 = arith.constant 0 : index
    %100 = vector.load %arg9[%99, %c0_99, %c0_100] : memref<1x18x18xf32, #tpu.memory_space<vmem>>, vector<1x18x18xf32>
    %101 = vector.shape_cast %100 : vector<1x18x18xf32> to vector<18x18xf32>
    %102 = vector.shape_cast %98 : vector<18x18xf32> to vector<1x18x18xf32>
    tpu.vector_store %arg9[%99, %c0_99, %c0_100], %102 {strides = array<i32>} : memref<1x18x18xf32, #tpu.memory_space<vmem>>, vector<1x18x18xf32>,
    %c0_i32_101 = arith.constant 0 : i32
    %103 = arith.cmpi eq, %arg1, %c0_i32_101 : i32
    %104 = arith.extui %103 : i1 to i32
    %c0_i32_102 = arith.constant 0 : i32
    %105 = arith.cmpi ne, %104, %c0_i32_102 : i32
    scf.if %105 {
      %106 = arith.index_cast %arg0 : i32 to index
      %c0_103 = arith.constant 0 : index
      %c0_104 = arith.constant 0 : index
      %107 = vector.load %arg9[%106, %c0_103, %c0_104] : memref<1x18x18xf32, #tpu.memory_space<vmem>>, vector<1x18x18xf32>
      %108 = vector.shape_cast %107 : vector<1x18x18xf32> to vector<18x18xf32>
      %109 = vector.shape_cast %108 : vector<18x18xf32> to vector<1x18x18xf32>
      %cst_105 = arith.constant dense<0.000000e+00> : vector<1xf32>
      %110 = vector.multi_reduction <add>, %109, %cst_105 [1, 2] : vector<1x18x18xf32> to vector<1xf32>
      %111 = vector.shape_cast %110 : vector<1xf32> to vector<1x1x1xf32>
      %112 = vector.extract %111[0, 0, 0] : f32 from vector<1x1x1xf32>
      %113 = vector.broadcast %112 : f32 to vector<1x8x128xf32>
      %c0_106 = arith.constant 0 : index
      %c0_107 = arith.constant 0 : index
      %c0_108 = arith.constant 0 : index
      %114 = vector.load %arg6[%c0_106, %c0_107, %c0_108] : memref<1x8x128xf32, #tpu.memory_space<vmem>>, vector<1x8x128xf32>
      tpu.vector_store %arg6[%c0_106, %c0_107, %c0_108], %113 {strides = array<i32>} : memref<1x8x128xf32, #tpu.memory_space<vmem>>, vector<1x8x128xf32>,
    } else {
    }
    return
  }
  func.func @transform_0(%arg0: i32, %arg1: i32) -> i32 {
    %c0_i32 = arith.constant 0 : i32
    %c0_i32_0 = arith.constant 0 : i32
    return %c0_i32 : i32
  }
  func.func @transform_1(%arg0: i32, %arg1: i32) -> i32 {
    %c0_i32 = arith.constant 0 : i32
    %c0_i32_0 = arith.constant 0 : i32
    return %c0_i32 : i32
  }
  func.func @transform_2(%arg0: i32, %arg1: i32) -> (i32, i32, i32) {
    %c1_i32 = arith.constant 1 : i32
    %0 = arith.muli %arg0, %c1_i32 : i32
    %1 = arith.addi %0, %arg1 : i32
    %c0_i32 = arith.constant 0 : i32
    %2 = arith.minsi %1, %c0_i32 : i32
    %c0_i32_0 = arith.constant 0 : i32
    %c0_i32_1 = arith.constant 0 : i32
    %c0_i32_2 = arith.constant 0 : i32
    return %2, %c0_i32_0, %c0_i32_1 : i32, i32, i32
  }
  func.func @transform_3(%arg0: i32, %arg1: i32) -> (i32, i32, i32) {
    %c1_i32 = arith.constant 1 : i32
    %0 = arith.muli %arg0, %c1_i32 : i32
    %1 = arith.addi %0, %arg1 : i32
    %c0_i32 = arith.constant 0 : i32
    %2 = arith.minsi %1, %c0_i32 : i32
    %c0_i32_0 = arith.constant 0 : i32
    %c0_i32_1 = arith.constant 0 : i32
    %c0_i32_2 = arith.constant 0 : i32
    return %2, %c0_i32_0, %c0_i32_1 : i32, i32, i32
  }
  func.func @transform_4(%arg0: i32, %arg1: i32) -> (i32, i32, i32) {
    %c0_i32 = arith.constant 0 : i32
    %c0_i32_0 = arith.constant 0 : i32
    %c0_i32_1 = arith.constant 0 : i32
    return %arg0, %c0_i32, %c0_i32_0 : i32, i32, i32
  }
}

</mosaic_0001>

<llo_original>
// kernel: tpu_custom_call.1
$region0: #{tpu_custom_call.1}
  #allocation0 [shape = 'u32[]', space=smem, size = 0x4, offset = 0x4, fixed_abs, tag = 'smem constant byte address 0x4 - core index']
  #allocation1 [shape = 'u32[72,128]{1,0:T(1,128)}', space=vmem, size = 0x9000, scoped, tag = 'internal scratch']
  #allocation2 [shape = 'f32[6,24,128]{2,1,0:T(8,128)}', space=vmem, size = 0x12000, scoped, tag = 'scratch operand']
  #allocation3 [shape = 'f32[6,24,128]{2,1,0:T(8,128)}', space=vmem, size = 0x12000, scoped, tag = 'scratch operand']
  #allocation4 [shape = 'f32[1,18,18]{2,1,0:T(8,128)}', space=vmem, size = 0x3000, scoped, tag = 'scratch operand']
  #allocation5 [shape = 'f32[1]{0:T(128)S(6)}', space=smem, size = 0x200, scoped, tag = 'scoped memory for tpu_custom_call.1']
  #allocation6 [shape = 's32[1]{0:T(128)S(6)}', space=smem, size = 0x200, scoped, tag = 'scoped memory for tpu_custom_call.1']
  %s0 = inlined_call_operand.<no memory space> [shape: f32[1], index: 0, kind: input, shape index: {}]
  %s1 = inlined_call_operand.<no memory space> [shape: s32[1], index: 1, kind: input, shape index: {}]
  %s2 = inlined_call_operand.hbm [shape: f32[6,16,16], index: 2, kind: input, shape index: {}]
  %s3 = inlined_call_operand.hbm [shape: f32[6,16,16], index: 3, kind: input, shape index: {}]
  %s4 = inlined_call_operand.hbm [shape: f32[1,8,128], index: 4, kind: output, shape index: {}]
  %s5 = sld [smem:[#allocation0]]
  $region42: #{tpu_custom_call.1} parent=0
    _
  %s7 = ssub.s32 1, %s5
  %s8 = scalar_select 0, %s7, %s5
  %9 = sst [smem:[#allocation5]] %s0
  %10 = sst [smem:[#allocation6]] %s1
  $region1: #{tpu_custom_call.1} parent=0
    #allocation7 [shape = 'u8[49152]{0}', space=vmem, size = 0xc000, scoped, tag = 'input window, operand 2, single buffered']
    #allocation8 [shape = 's32[1]{0}', space=sflag, size = 0x4, scoped, tag = 'scoped memory for tpu_custom_call.1']
    #allocation9 [shape = 's32[1]{0}', space=sflag, size = 0x4, scoped, tag = 'scoped memory for tpu_custom_call.1']
    #allocation10 [shape = 'u8[49152]{0}', space=vmem, size = 0xc000, scoped, tag = 'input window, operand 3, single buffered']
    #allocation11 [shape = 's32[1]{0}', space=sflag, size = 0x4, scoped, tag = 'scoped memory for tpu_custom_call.1']
    #allocation12 [shape = 'u8[4096]{0}', space=vmem, size = 0x1000, scoped, tag = 'output window, operand 0, single buffered']
    %11 = vsyncpa [#allocation8], 0
    %12 = vsyncpa [#allocation11], 0
    %13 = vsyncpa [#allocation9], 0
    // Predicated region
    $region2: #{tpu_custom_call.1} parent=1 // pred_check
      _
    $region3: #{tpu_custom_call.1} parent=1 // pred_check_branch
      %15 = sbr.rel (0) target = $region5
    $region4: #{tpu_custom_call.1} parent=1 // pred_region
      _
    $region5: #{tpu_custom_call.1} parent=1 // pred_fallthru
      _
    // Predicated region
    $region6: #{tpu_custom_call.1} parent=1 // pred_check
      _
    $region7: #{tpu_custom_call.1} parent=1 // pred_check_branch
      %17 = sbr.rel (0) target = $region9
    $region8: #{tpu_custom_call.1} parent=1 // pred_region
      _
    $region9: #{tpu_custom_call.1} parent=1 // pred_fallthru
      _
    // Predicated region
    $region10: #{tpu_custom_call.1} parent=1 // pred_check
      _
    $region11: #{tpu_custom_call.1} parent=1 // pred_check_branch
      %19 = sbr.rel (0) target = $region13
    $region12: #{tpu_custom_call.1} parent=1 // pred_region
      %s20 = sadd.s32 0, 0
      %p21 = scmp.lt.s32.totalorder %s20, 0
      %s22 = scalar_select %p21, %s20, 0
      %s23 = smul.u32 6, %s22
      %25 = vsyncadd [#allocation8], 0
      %s26 = smul.addr %s23, 2
      %s27 = smul.addr %s26, 8
      %s28 = scalar_lea.hbm %s2, %s27
      %s29 = sshll.u32 %s28, 4
      %s30 = int_to_ptr.hbm [resolvable:$true] %s29
      %s31 = sshll.u32 [#allocation7], 4
      %s32 = int_to_ptr.vmem [resolvable:$true] %s31
      %37 = dma.hbm_to_vmem [thread:$0]  %s30, 1536, %s32, [#allocation8], 128, 128, 8
    $region13: #{tpu_custom_call.1} parent=1 // pred_fallthru
      _
    // Predicated region
    $region14: #{tpu_custom_call.1} parent=1 // pred_check
      _
    $region15: #{tpu_custom_call.1} parent=1 // pred_check_branch
      %39 = sbr.rel (0) target = $region17
    $region16: #{tpu_custom_call.1} parent=1 // pred_region
      %s40 = sadd.s32 0, 0
      %p41 = scmp.lt.s32.totalorder %s40, 0
      %s42 = scalar_select %p41, %s40, 0
      %s43 = smul.u32 6, %s42
      %45 = vsyncadd [#allocation11], 0
      %s46 = smul.addr %s43, 2
      %s47 = smul.addr %s46, 8
      %s48 = scalar_lea.hbm %s3, %s47
      %s49 = sshll.u32 %s48, 4
      %s50 = int_to_ptr.hbm [resolvable:$true] %s49
      %s51 = sshll.u32 [#allocation10], 4
      %s52 = int_to_ptr.vmem [resolvable:$true] %s51
      %57 = dma.hbm_to_vmem [thread:$0]  %s50, 1536, %s52, [#allocation11], 128, 128, 8
    $region17: #{tpu_custom_call.1} parent=1 // pred_fallthru
      _
    // Predicated region
    $region18: #{tpu_custom_call.1} parent=1 // pred_check
      _
    $region19: #{tpu_custom_call.1} parent=1 // pred_check_branch
      %59 = sbr.rel (0) target = $region21
    $region20: #{tpu_custom_call.1} parent=1 // pred_region
      %61 = dma.done [#allocation8], 1536
    $region21: #{tpu_custom_call.1} parent=1 // pred_fallthru
      _
    // Predicated region
    $region22: #{tpu_custom_call.1} parent=1 // pred_check
      _
    $region23: #{tpu_custom_call.1} parent=1 // pred_check_branch
      %63 = sbr.rel (0) target = $region25
    $region24: #{tpu_custom_call.1} parent=1 // pred_region
      %65 = dma.done [#allocation11], 1536
    $region25: #{tpu_custom_call.1} parent=1 // pred_fallthru
      _
    %s66 = sadd.s32 0, 0
    %p67 = scmp.lt.s32.totalorder %s66, 0
    %s68 = scalar_select %p67, %s66, 0
    %s69 = smul.u32 6, %s68
    %s70 = sadd.s32 0, 0
    %p71 = scmp.lt.s32.totalorder %s70, 0
    %s72 = scalar_select %p71, %s70, 0
    %s73 = smul.u32 6, %s72
    %p74 = scmp.eq.s32.totalorder 0, 0
    // Predicated region
    $region26: #{tpu_custom_call.1} parent=1 // pred_check
      %p75 = pneg %p74
    $region27: #{tpu_custom_call.1} parent=1 // pred_check_branch
      %77 = sbr.rel (%p75) target = $region29
    $region28: #{tpu_custom_call.1} parent=1 // pred_region
      %s78 = smul.u32 0, 24
      %s79 = scalar_lea.vmem [#allocation4], %s78
      %vm80 = vcmask 146432
      %81 = vst.msk [vmem:[%s79] sm:$0xff] %vm80, 0.0
      %82 = vst.msk [vmem:[%s79 + $0x8] sm:$0xff] %vm80, 0.0
      %vm83 = vcmask 140288
      %84 = vst.msk [vmem:[%s79 + $0x10] sm:$0x3] %vm83, 0.0
      %85 = vst [vmem:[#allocation2] sm:$0xff] 0.0
      %86 = vst [vmem:[#allocation2 + $0x8] sm:$0xff] 0.0
      %87 = vst [vmem:[#allocation2 + $0x10] sm:$0xff] 0.0
      %88 = vst [vmem:[#allocation2 + $0x18] sm:$0xff] 0.0
      %89 = vst [vmem:[#allocation2 + $0x20] sm:$0xff] 0.0
      %90 = vst [vmem:[#allocation2 + $0x28] sm:$0xff] 0.0
      %91 = vst [vmem:[#allocation2 + $0x30] sm:$0xff] 0.0
      %92 = vst [vmem:[#allocation2 + $0x38] sm:$0xff] 0.0
      %93 = vst [vmem:[#allocation2 + $0x40] sm:$0xff] 0.0
      %94 = vst [vmem:[#allocation2 + $0x48] sm:$0xff] 0.0
      %95 = vst [vmem:[#allocation2 + $0x50] sm:$0xff] 0.0
      %96 = vst [vmem:[#allocation2 + $0x58] sm:$0xff] 0.0
      %97 = vst [vmem:[#allocation2 + $0x60] sm:$0xff] 0.0
      %98 = vst [vmem:[#allocation2 + $0x68] sm:$0xff] 0.0
      %99 = vst [vmem:[#allocation2 + $0x70] sm:$0xff] 0.0
      %100 = vst [vmem:[#allocation2 + $0x78] sm:$0xff] 0.0
      %101 = vst [vmem:[#allocation2 + $0x80] sm:$0xff] 0.0
      %102 = vst [vmem:[#allocation2 + $0x88] sm:$0xff] 0.0
      %103 = vst [vmem:[#allocation3] sm:$0xff] 0.0
      %104 = vst [vmem:[#allocation3 + $0x8] sm:$0xff] 0.0
      %105 = vst [vmem:[#allocation3 + $0x10] sm:$0xff] 0.0
      %106 = vst [vmem:[#allocation3 + $0x18] sm:$0xff] 0.0
      %107 = vst [vmem:[#allocation3 + $0x20] sm:$0xff] 0.0
      %108 = vst [vmem:[#allocation3 + $0x28] sm:$0xff] 0.0
      %109 = vst [vmem:[#allocation3 + $0x30] sm:$0xff] 0.0
      %110 = vst [vmem:[#allocation3 + $0x38] sm:$0xff] 0.0
      %111 = vst [vmem:[#allocation3 + $0x40] sm:$0xff] 0.0
      %112 = vst [vmem:[#allocation3 + $0x48] sm:$0xff] 0.0
      %113 = vst [vmem:[#allocation3 + $0x50] sm:$0xff] 0.0
      %114 = vst [vmem:[#allocation3 + $0x58] sm:$0xff] 0.0
      %115 = vst [vmem:[#allocation3 + $0x60] sm:$0xff] 0.0
      %116 = vst [vmem:[#allocation3 + $0x68] sm:$0xff] 0.0
      %117 = vst [vmem:[#allocation3 + $0x70] sm:$0xff] 0.0
      %118 = vst [vmem:[#allocation3 + $0x78] sm:$0xff] 0.0
      %119 = vst [vmem:[#allocation3 + $0x80] sm:$0xff] 0.0
      %120 = vst [vmem:[#allocation3 + $0x88] sm:$0xff] 0.0
    $region29: #{tpu_custom_call.1} parent=1 // pred_fallthru
      _
    %s121 = sld [smem:[#allocation5]]
    %v122 = vld [vmem:[#allocation7] sm:$0xff]
    %v123 = vld [vmem:[#allocation7 + $0x8] sm:$0xff]
    %v124 = vld [vmem:[#allocation7 + $0x10] sm:$0xff]
    %v125 = vld [vmem:[#allocation7 + $0x18] sm:$0xff]
    %v126 = vld [vmem:[#allocation7 + $0x20] sm:$0xff]
    %v127 = vld [vmem:[#allocation7 + $0x28] sm:$0xff]
    %v128 = vld [vmem:[#allocation7 + $0x30] sm:$0xff]
    %v129 = vld [vmem:[#allocation7 + $0x38] sm:$0xff]
    %v130 = vld [vmem:[#allocation7 + $0x40] sm:$0xff]
    %v131 = vld [vmem:[#allocation7 + $0x48] sm:$0xff]
    %v132 = vld [vmem:[#allocation7 + $0x50] sm:$0xff]
    %v133 = vld [vmem:[#allocation7 + $0x58] sm:$0xff]
    %v134 = vstv %s121
    %v135 = vmul.f32 %v122, %v134
    %v136 = vmul.f32 %v123, %v134
    %v137 = vmul.f32 %v124, %v134
    %v138 = vmul.f32 %v125, %v134
    %v139 = vmul.f32 %v126, %v134
    %v140 = vmul.f32 %v127, %v134
    %v141 = vmul.f32 %v128, %v134
    %v142 = vmul.f32 %v129, %v134
    %v143 = vmul.f32 %v130, %v134
    %v144 = vmul.f32 %v131, %v134
    %v145 = vmul.f32 %v132, %v134
    %v146 = vmul.f32 %v133, %v134
    %v147 = vtanh.pop %v135
    %v148 = vtanh.pop %v136
    %v149 = vtanh.pop %v137
    %v150 = vtanh.pop %v138
    %v151 = vtanh.pop %v139
    %v152 = vtanh.pop %v140
    %v153 = vtanh.pop %v141
    %v154 = vtanh.pop %v142
    %v155 = vtanh.pop %v143
    %v156 = vtanh.pop %v144
    %v157 = vtanh.pop %v145
    %v158 = vtanh.pop %v146
    %v159 = vmul.f32 %v147, 5000.0
    %v160 = vmul.f32 %v148, 5000.0
    %v161 = vmul.f32 %v149, 5000.0
    %v162 = vmul.f32 %v150, 5000.0
    %v163 = vmul.f32 %v151, 5000.0
    %v164 = vmul.f32 %v152, 5000.0
    %v165 = vmul.f32 %v153, 5000.0
    %v166 = vmul.f32 %v154, 5000.0
    %v167 = vmul.f32 %v155, 5000.0
    %v168 = vmul.f32 %v156, 5000.0
    %v169 = vmul.f32 %v157, 5000.0
    %v170 = vmul.f32 %v158, 5000.0
    %v171 = vadd.f32 %v159, 1.0
    %v172 = vadd.f32 %v160, 1.0
    %v173 = vadd.f32 %v161, 1.0
    %v174 = vadd.f32 %v162, 1.0
    %v175 = vadd.f32 %v163, 1.0
    %v176 = vadd.f32 %v164, 1.0
    %v177 = vadd.f32 %v165, 1.0
    %v178 = vadd.f32 %v166, 1.0
    %v179 = vadd.f32 %v167, 1.0
    %v180 = vadd.f32 %v168, 1.0
    %v181 = vadd.f32 %v169, 1.0
    %v182 = vadd.f32 %v170, 1.0
    %v183 = vlog2.pop %v171
    %v184 = vmul.f32 %v183, 0.6931472
    %v185 = vlog2.pop %v172
    %v186 = vmul.f32 %v185, 0.6931472
    %v187 = vlog2.pop %v173
    %v188 = vmul.f32 %v187, 0.6931472
    %v189 = vlog2.pop %v174
    %v190 = vmul.f32 %v189, 0.6931472
    %v191 = vlog2.pop %v175
    %v192 = vmul.f32 %v191, 0.6931472
    %v193 = vlog2.pop %v176
    %v194 = vmul.f32 %v193, 0.6931472
    %v195 = vlog2.pop %v177
    %v196 = vmul.f32 %v195, 0.6931472
    %v197 = vlog2.pop %v178
    %v198 = vmul.f32 %v197, 0.6931472
    %v199 = vlog2.pop %v179
    %v200 = vmul.f32 %v199, 0.6931472
    %v201 = vlog2.pop %v180
    %v202 = vmul.f32 %v201, 0.6931472
    %v203 = vlog2.pop %v181
    %v204 = vmul.f32 %v203, 0.6931472
    %v205 = vlog2.pop %v182
    %v206 = vmul.f32 %v205, 0.6931472
    %v207 = vmul.f32 %v184, 0.117406815
    %v208 = vmul.f32 %v186, 0.117406815
    %v209 = vmul.f32 %v188, 0.117406815
    %v210 = vmul.f32 %v190, 0.117406815
    %v211 = vmul.f32 %v192, 0.117406815
    %v212 = vmul.f32 %v194, 0.117406815
    %v213 = vmul.f32 %v196, 0.117406815
    %v214 = vmul.f32 %v198, 0.117406815
    %v215 = vmul.f32 %v200, 0.117406815
    %v216 = vmul.f32 %v202, 0.117406815
    %v217 = vmul.f32 %v204, 0.117406815
    %v218 = vmul.f32 %v206, 0.117406815
    %231 = vrot.lane.b32.xlu0 %v207, 2
    %v232 = vpop.permute.xlu0 %231
    %233 = vrot.lane.b32.xlu0 %v208, 2
    %v234 = vpop.permute.xlu0 %233
    %235 = vrot.lane.b32.xlu0 %v209, 2
    %v236 = vpop.permute.xlu0 %235
    %237 = vrot.lane.b32.xlu0 %v210, 2
    %v238 = vpop.permute.xlu0 %237
    %239 = vrot.lane.b32.xlu0 %v211, 2
    %v240 = vpop.permute.xlu0 %239
    %241 = vrot.lane.b32.xlu0 %v212, 2
    %v242 = vpop.permute.xlu0 %241
    %243 = vrot.lane.b32.xlu0 %v213, 2
    %v244 = vpop.permute.xlu0 %243
    %245 = vrot.lane.b32.xlu0 %v214, 2
    %v246 = vpop.permute.xlu0 %245
    %247 = vrot.lane.b32.xlu0 %v215, 2
    %v248 = vpop.permute.xlu0 %247
    %249 = vrot.lane.b32.xlu0 %v216, 2
    %v250 = vpop.permute.xlu0 %249
    %251 = vrot.lane.b32.xlu0 %v217, 2
    %v252 = vpop.permute.xlu0 %251
    %253 = vrot.lane.b32.xlu0 %v218, 2
    %v254 = vpop.permute.xlu0 %253
    %vm267 = vcmask 146448
    %268 = vst.msk [vmem:[#allocation2 + $0x2] sm:$0xff] %vm267, %v232
    %269 = vst.msk [vmem:[#allocation2 + $0xa] sm:$0xff] %vm267, %v234
    %270 = vst.msk [vmem:[#allocation2 + $0x1a] sm:$0xff] %vm267, %v236
    %271 = vst.msk [vmem:[#allocation2 + $0x22] sm:$0xff] %vm267, %v238
    %272 = vst.msk [vmem:[#allocation2 + $0x32] sm:$0xff] %vm267, %v240
    %273 = vst.msk [vmem:[#allocation2 + $0x3a] sm:$0xff] %vm267, %v242
    %274 = vst.msk [vmem:[#allocation2 + $0x4a] sm:$0xff] %vm267, %v244
    %275 = vst.msk [vmem:[#allocation2 + $0x52] sm:$0xff] %vm267, %v246
    %276 = vst.msk [vmem:[#allocation2 + $0x62] sm:$0xff] %vm267, %v248
    %277 = vst.msk [vmem:[#allocation2 + $0x6a] sm:$0xff] %vm267, %v250
    %278 = vst.msk [vmem:[#allocation2 + $0x7a] sm:$0xff] %vm267, %v252
    %279 = vst.msk [vmem:[#allocation2 + $0x82] sm:$0xff] %vm267, %v254
    %280 = vrot.lane.b32.xlu0 %v207, 126
    %v281 = vpop.permute.xlu0 %280
    %282 = vrot.lane.b32.xlu0 %v208, 126
    %v283 = vpop.permute.xlu0 %282
    %284 = vrot.lane.b32.xlu0 %v209, 126
    %v285 = vpop.permute.xlu0 %284
    %286 = vrot.lane.b32.xlu0 %v210, 126
    %v287 = vpop.permute.xlu0 %286
    %288 = vrot.lane.b32.xlu0 %v211, 126
    %v289 = vpop.permute.xlu0 %288
    %290 = vrot.lane.b32.xlu0 %v212, 126
    %v291 = vpop.permute.xlu0 %290
    %292 = vrot.lane.b32.xlu0 %v213, 126
    %v293 = vpop.permute.xlu0 %292
    %294 = vrot.lane.b32.xlu0 %v214, 126
    %v295 = vpop.permute.xlu0 %294
    %296 = vrot.lane.b32.xlu0 %v215, 126
    %v297 = vpop.permute.xlu0 %296
    %298 = vrot.lane.b32.xlu0 %v216, 126
    %v299 = vpop.permute.xlu0 %298
    %300 = vrot.lane.b32.xlu0 %v217, 126
    %v301 = vpop.permute.xlu0 %300
    %302 = vrot.lane.b32.xlu0 %v218, 126
    %v303 = vpop.permute.xlu0 %302
    %vm316 = vcmask 7168
    %317 = vst.msk [vmem:[#allocation2 + $0x2] sm:$0xff] %vm316, %v281
    %318 = vst.msk [vmem:[#allocation2 + $0xa] sm:$0xff] %vm316, %v283
    %319 = vst.msk [vmem:[#allocation2 + $0x1a] sm:$0xff] %vm316, %v285
    %320 = vst.msk [vmem:[#allocation2 + $0x22] sm:$0xff] %vm316, %v287
    %321 = vst.msk [vmem:[#allocation2 + $0x32] sm:$0xff] %vm316, %v289
    %322 = vst.msk [vmem:[#allocation2 + $0x3a] sm:$0xff] %vm316, %v291
    %323 = vst.msk [vmem:[#allocation2 + $0x4a] sm:$0xff] %vm316, %v293
    %324 = vst.msk [vmem:[#allocation2 + $0x52] sm:$0xff] %vm316, %v295
    %325 = vst.msk [vmem:[#allocation2 + $0x62] sm:$0xff] %vm316, %v297
    %326 = vst.msk [vmem:[#allocation2 + $0x6a] sm:$0xff] %vm316, %v299
    %327 = vst.msk [vmem:[#allocation2 + $0x7a] sm:$0xff] %vm316, %v301
    %328 = vst.msk [vmem:[#allocation2 + $0x82] sm:$0xff] %vm316, %v303
    %vm329 = vcmask 15368
    %330 = vst.msk [vmem:[#allocation2 + $0x2] sm:$0xff] %vm329, %v207
    %331 = vst.msk [vmem:[#allocation2 + $0xa] sm:$0xff] %vm329, %v208
    %332 = vst.msk [vmem:[#allocation2 + $0x1a] sm:$0xff] %vm329, %v209
    %333 = vst.msk [vmem:[#allocation2 + $0x22] sm:$0xff] %vm329, %v210
    %334 = vst.msk [vmem:[#allocation2 + $0x32] sm:$0xff] %vm329, %v211
    %335 = vst.msk [vmem:[#allocation2 + $0x3a] sm:$0xff] %vm329, %v212
    %336 = vst.msk [vmem:[#allocation2 + $0x4a] sm:$0xff] %vm329, %v213
    %337 = vst.msk [vmem:[#allocation2 + $0x52] sm:$0xff] %vm329, %v214
    %338 = vst.msk [vmem:[#allocation2 + $0x62] sm:$0xff] %vm329, %v215
    %339 = vst.msk [vmem:[#allocation2 + $0x6a] sm:$0xff] %vm329, %v216
    %340 = vst.msk [vmem:[#allocation2 + $0x7a] sm:$0xff] %vm329, %v217
    %341 = vst.msk [vmem:[#allocation2 + $0x82] sm:$0xff] %vm329, %v218
    %342 = vrot.lane.b32.xlu0 %v207, 4
    %v343 = vpop.permute.xlu0 %342
    %344 = vrot.lane.b32.xlu0 %v208, 4
    %v345 = vpop.permute.xlu0 %344
    %346 = vrot.lane.b32.xlu0 %v209, 4
    %v347 = vpop.permute.xlu0 %346
    %348 = vrot.lane.b32.xlu0 %v210, 4
    %v349 = vpop.permute.xlu0 %348
    %350 = vrot.lane.b32.xlu0 %v211, 4
    %v351 = vpop.permute.xlu0 %350
    %352 = vrot.lane.b32.xlu0 %v212, 4
    %v353 = vpop.permute.xlu0 %352
    %354 = vrot.lane.b32.xlu0 %v213, 4
    %v355 = vpop.permute.xlu0 %354
    %356 = vrot.lane.b32.xlu0 %v214, 4
    %v357 = vpop.permute.xlu0 %356
    %358 = vrot.lane.b32.xlu0 %v215, 4
    %v359 = vpop.permute.xlu0 %358
    %360 = vrot.lane.b32.xlu0 %v216, 4
    %v361 = vpop.permute.xlu0 %360
    %362 = vrot.lane.b32.xlu0 %v217, 4
    %v363 = vpop.permute.xlu0 %362
    %364 = vrot.lane.b32.xlu0 %v218, 4
    %v365 = vpop.permute.xlu0 %364
    %vm378 = vcmask 154768
    %379 = vst.msk [vmem:[#allocation2 + $0x2] sm:$0xff] %vm378, %v343
    %380 = vst.msk [vmem:[#allocation2 + $0xa] sm:$0xff] %vm378, %v345
    %381 = vst.msk [vmem:[#allocation2 + $0x1a] sm:$0xff] %vm378, %v347
    %382 = vst.msk [vmem:[#allocation2 + $0x22] sm:$0xff] %vm378, %v349
    %383 = vst.msk [vmem:[#allocation2 + $0x32] sm:$0xff] %vm378, %v351
    %384 = vst.msk [vmem:[#allocation2 + $0x3a] sm:$0xff] %vm378, %v353
    %385 = vst.msk [vmem:[#allocation2 + $0x4a] sm:$0xff] %vm378, %v355
    %386 = vst.msk [vmem:[#allocation2 + $0x52] sm:$0xff] %vm378, %v357
    %387 = vst.msk [vmem:[#allocation2 + $0x62] sm:$0xff] %vm378, %v359
    %388 = vst.msk [vmem:[#allocation2 + $0x6a] sm:$0xff] %vm378, %v361
    %389 = vst.msk [vmem:[#allocation2 + $0x7a] sm:$0xff] %vm378, %v363
    %390 = vst.msk [vmem:[#allocation2 + $0x82] sm:$0xff] %vm378, %v365
    %391 = vrot.lane.b32.xlu0 %v207, 6
    %v392 = vpop.permute.xlu0 %391
    %393 = vrot.lane.b32.xlu0 %v208, 6
    %v394 = vpop.permute.xlu0 %393
    %395 = vrot.lane.b32.xlu0 %v209, 6
    %v396 = vpop.permute.xlu0 %395
    %397 = vrot.lane.b32.xlu0 %v210, 6
    %v398 = vpop.permute.xlu0 %397
    %399 = vrot.lane.b32.xlu0 %v211, 6
    %v400 = vpop.permute.xlu0 %399
    %401 = vrot.lane.b32.xlu0 %v212, 6
    %v402 = vpop.permute.xlu0 %401
    %403 = vrot.lane.b32.xlu0 %v213, 6
    %v404 = vpop.permute.xlu0 %403
    %405 = vrot.lane.b32.xlu0 %v214, 6
    %v406 = vpop.permute.xlu0 %405
    %407 = vrot.lane.b32.xlu0 %v215, 6
    %v408 = vpop.permute.xlu0 %407
    %409 = vrot.lane.b32.xlu0 %v216, 6
    %v410 = vpop.permute.xlu0 %409
    %411 = vrot.lane.b32.xlu0 %v217, 6
    %v412 = vpop.permute.xlu0 %411
    %413 = vrot.lane.b32.xlu0 %v218, 6
    %v414 = vpop.permute.xlu0 %413
    %vm427 = vcmask 162968
    %428 = vst.msk [vmem:[#allocation2 + $0x2] sm:$0xff] %vm427, %v392
    %429 = vst.msk [vmem:[#allocation2 + $0xa] sm:$0xff] %vm427, %v394
    %430 = vst.msk [vmem:[#allocation2 + $0x1a] sm:$0xff] %vm427, %v396
    %431 = vst.msk [vmem:[#allocation2 + $0x22] sm:$0xff] %vm427, %v398
    %432 = vst.msk [vmem:[#allocation2 + $0x32] sm:$0xff] %vm427, %v400
    %433 = vst.msk [vmem:[#allocation2 + $0x3a] sm:$0xff] %vm427, %v402
    %434 = vst.msk [vmem:[#allocation2 + $0x4a] sm:$0xff] %vm427, %v404
    %435 = vst.msk [vmem:[#allocation2 + $0x52] sm:$0xff] %vm427, %v406
    %436 = vst.msk [vmem:[#allocation2 + $0x62] sm:$0xff] %vm427, %v408
    %437 = vst.msk [vmem:[#allocation2 + $0x6a] sm:$0xff] %vm427, %v410
    %438 = vst.msk [vmem:[#allocation2 + $0x7a] sm:$0xff] %vm427, %v412
    %439 = vst.msk [vmem:[#allocation2 + $0x82] sm:$0xff] %vm427, %v414
    %v440 = vld [vmem:[#allocation2 + $0x4] sm:$0x1]
    %v441 = vld [vmem:[#allocation2 + $0x1c] sm:$0x1]
    %v442 = vld [vmem:[#allocation2 + $0x34] sm:$0x1]
    %v443 = vld [vmem:[#allocation2 + $0x4c] sm:$0x1]
    %v444 = vld [vmem:[#allocation2 + $0x64] sm:$0x1]
    %v445 = vld [vmem:[#allocation2 + $0x7c] sm:$0x1]
    %446 = vst [vmem:[#allocation2] sm:$0x1] %v440
    %447 = vst [vmem:[#allocation2 + $0x18] sm:$0x1] %v441
    %448 = vst [vmem:[#allocation2 + $0x30] sm:$0x1] %v442
    %449 = vst [vmem:[#allocation2 + $0x48] sm:$0x1] %v443
    %450 = vst [vmem:[#allocation2 + $0x60] sm:$0x1] %v444
    %451 = vst [vmem:[#allocation2 + $0x78] sm:$0x1] %v445
    %v452 = vld [vmem:[#allocation2 + $0x3] sm:$0x1]
    %v453 = vld [vmem:[#allocation2 + $0x1b] sm:$0x1]
    %v454 = vld [vmem:[#allocation2 + $0x33] sm:$0x1]
    %v455 = vld [vmem:[#allocation2 + $0x4b] sm:$0x1]
    %v456 = vld [vmem:[#allocation2 + $0x63] sm:$0x1]
    %v457 = vld [vmem:[#allocation2 + $0x7b] sm:$0x1]
    %458 = vst [vmem:[#allocation2 + $0x1] sm:$0x1] %v452
    %459 = vst [vmem:[#allocation2 + $0x19] sm:$0x1] %v453
    %460 = vst [vmem:[#allocation2 + $0x31] sm:$0x1] %v454
    %461 = vst [vmem:[#allocation2 + $0x49] sm:$0x1] %v455
    %462 = vst [vmem:[#allocation2 + $0x61] sm:$0x1] %v456
    %463 = vst [vmem:[#allocation2 + $0x79] sm:$0x1] %v457
    %v464 = vld [vmem:[#allocation2 + $0x10] sm:$0x1]
    %v465 = vld [vmem:[#allocation2 + $0x28] sm:$0x1]
    %v466 = vld [vmem:[#allocation2 + $0x40] sm:$0x1]
    %v467 = vld [vmem:[#allocation2 + $0x58] sm:$0x1]
    %v468 = vld [vmem:[#allocation2 + $0x70] sm:$0x1]
    %v469 = vld [vmem:[#allocation2 + $0x88] sm:$0x1]
    %470 = vst [vmem:[#allocation2 + $0x12] sm:$0x1] %v464
    %471 = vst [vmem:[#allocation2 + $0x2a] sm:$0x1] %v465
    %472 = vst [vmem:[#allocation2 + $0x42] sm:$0x1] %v466
    %473 = vst [vmem:[#allocation2 + $0x5a] sm:$0x1] %v467
    %474 = vst [vmem:[#allocation2 + $0x72] sm:$0x1] %v468
    %475 = vst [vmem:[#allocation2 + $0x8a] sm:$0x1] %v469
    %v476 = vld [vmem:[#allocation2 + $0xf] sm:$0x1]
    %v477 = vld [vmem:[#allocation2 + $0x27] sm:$0x1]
    %v478 = vld [vmem:[#allocation2 + $0x3f] sm:$0x1]
    %v479 = vld [vmem:[#allocation2 + $0x57] sm:$0x1]
    %v480 = vld [vmem:[#allocation2 + $0x6f] sm:$0x1]
    %v481 = vld [vmem:[#allocation2 + $0x87] sm:$0x1]
    %482 = vst [vmem:[#allocation2 + $0x13] sm:$0x1] %v476
    %483 = vst [vmem:[#allocation2 + $0x2b] sm:$0x1] %v477
    %484 = vst [vmem:[#allocation2 + $0x43] sm:$0x1] %v478
    %485 = vst [vmem:[#allocation2 + $0x5b] sm:$0x1] %v479
    %486 = vst [vmem:[#allocation2 + $0x73] sm:$0x1] %v480
    %487 = vst [vmem:[#allocation2 + $0x8b] sm:$0x1] %v481
    %v488 = vld [vmem:[#allocation10] sm:$0xff]
    %v489 = vld [vmem:[#allocation10 + $0x8] sm:$0xff]
    %v490 = vld [vmem:[#allocation10 + $0x10] sm:$0xff]
    %v491 = vld [vmem:[#allocation10 + $0x18] sm:$0xff]
    %v492 = vld [vmem:[#allocation10 + $0x20] sm:$0xff]
    %v493 = vld [vmem:[#allocation10 + $0x28] sm:$0xff]
    %v494 = vld [vmem:[#allocation10 + $0x30] sm:$0xff]
    %v495 = vld [vmem:[#allocation10 + $0x38] sm:$0xff]
    %v496 = vld [vmem:[#allocation10 + $0x40] sm:$0xff]
    %v497 = vld [vmem:[#allocation10 + $0x48] sm:$0xff]
    %v498 = vld [vmem:[#allocation10 + $0x50] sm:$0xff]
    %v499 = vld [vmem:[#allocation10 + $0x58] sm:$0xff]
    %v500 = vmul.f32 %v488, %v134
    %v501 = vmul.f32 %v489, %v134
    %v502 = vmul.f32 %v490, %v134
    %v503 = vmul.f32 %v491, %v134
    %v504 = vmul.f32 %v492, %v134
    %v505 = vmul.f32 %v493, %v134
    %v506 = vmul.f32 %v494, %v134
    %v507 = vmul.f32 %v495, %v134
    %v508 = vmul.f32 %v496, %v134
    %v509 = vmul.f32 %v497, %v134
    %v510 = vmul.f32 %v498, %v134
    %v511 = vmul.f32 %v499, %v134
    %v512 = vtanh.pop %v500
    %v513 = vtanh.pop %v501
    %v514 = vtanh.pop %v502
    %v515 = vtanh.pop %v503
    %v516 = vtanh.pop %v504
    %v517 = vtanh.pop %v505
    %v518 = vtanh.pop %v506
    %v519 = vtanh.pop %v507
    %v520 = vtanh.pop %v508
    %v521 = vtanh.pop %v509
    %v522 = vtanh.pop %v510
    %v523 = vtanh.pop %v511
    %v524 = vmul.f32 %v512, 5000.0
    %v525 = vmul.f32 %v513, 5000.0
    %v526 = vmul.f32 %v514, 5000.0
    %v527 = vmul.f32 %v515, 5000.0
    %v528 = vmul.f32 %v516, 5000.0
    %v529 = vmul.f32 %v517, 5000.0
    %v530 = vmul.f32 %v518, 5000.0
    %v531 = vmul.f32 %v519, 5000.0
    %v532 = vmul.f32 %v520, 5000.0
    %v533 = vmul.f32 %v521, 5000.0
    %v534 = vmul.f32 %v522, 5000.0
    %v535 = vmul.f32 %v523, 5000.0
    %v536 = vadd.f32 %v524, 1.0
    %v537 = vadd.f32 %v525, 1.0
    %v538 = vadd.f32 %v526, 1.0
    %v539 = vadd.f32 %v527, 1.0
    %v540 = vadd.f32 %v528, 1.0
    %v541 = vadd.f32 %v529, 1.0
    %v542 = vadd.f32 %v530, 1.0
    %v543 = vadd.f32 %v531, 1.0
    %v544 = vadd.f32 %v532, 1.0
    %v545 = vadd.f32 %v533, 1.0
    %v546 = vadd.f32 %v534, 1.0
    %v547 = vadd.f32 %v535, 1.0
    %v548 = vlog2.pop %v536
    %v549 = vmul.f32 %v548, 0.6931472
    %v550 = vlog2.pop %v537
    %v551 = vmul.f32 %v550, 0.6931472
    %v552 = vlog2.pop %v538
    %v553 = vmul.f32 %v552, 0.6931472
    %v554 = vlog2.pop %v539
    %v555 = vmul.f32 %v554, 0.6931472
    %v556 = vlog2.pop %v540
    %v557 = vmul.f32 %v556, 0.6931472
    %v558 = vlog2.pop %v541
    %v559 = vmul.f32 %v558, 0.6931472
    %v560 = vlog2.pop %v542
    %v561 = vmul.f32 %v560, 0.6931472
    %v562 = vlog2.pop %v543
    %v563 = vmul.f32 %v562, 0.6931472
    %v564 = vlog2.pop %v544
    %v565 = vmul.f32 %v564, 0.6931472
    %v566 = vlog2.pop %v545
    %v567 = vmul.f32 %v566, 0.6931472
    %v568 = vlog2.pop %v546
    %v569 = vmul.f32 %v568, 0.6931472
    %v570 = vlog2.pop %v547
    %v571 = vmul.f32 %v570, 0.6931472
    %v572 = vmul.f32 %v549, 0.117406815
    %v573 = vmul.f32 %v551, 0.117406815
    %v574 = vmul.f32 %v553, 0.117406815
    %v575 = vmul.f32 %v555, 0.117406815
    %v576 = vmul.f32 %v557, 0.117406815
    %v577 = vmul.f32 %v559, 0.117406815
    %v578 = vmul.f32 %v561, 0.117406815
    %v579 = vmul.f32 %v563, 0.117406815
    %v580 = vmul.f32 %v565, 0.117406815
    %v581 = vmul.f32 %v567, 0.117406815
    %v582 = vmul.f32 %v569, 0.117406815
    %v583 = vmul.f32 %v571, 0.117406815
    %596 = vrot.lane.b32.xlu0 %v572, 2
    %v597 = vpop.permute.xlu0 %596
    %598 = vrot.lane.b32.xlu0 %v573, 2
    %v599 = vpop.permute.xlu0 %598
    %600 = vrot.lane.b32.xlu0 %v574, 2
    %v601 = vpop.permute.xlu0 %600
    %602 = vrot.lane.b32.xlu0 %v575, 2
    %v603 = vpop.permute.xlu0 %602
    %604 = vrot.lane.b32.xlu0 %v576, 2
    %v605 = vpop.permute.xlu0 %604
    %606 = vrot.lane.b32.xlu0 %v577, 2
    %v607 = vpop.permute.xlu0 %606
    %608 = vrot.lane.b32.xlu0 %v578, 2
    %v609 = vpop.permute.xlu0 %608
    %610 = vrot.lane.b32.xlu0 %v579, 2
    %v611 = vpop.permute.xlu0 %610
    %612 = vrot.lane.b32.xlu0 %v580, 2
    %v613 = vpop.permute.xlu0 %612
    %614 = vrot.lane.b32.xlu0 %v581, 2
    %v615 = vpop.permute.xlu0 %614
    %616 = vrot.lane.b32.xlu0 %v582, 2
    %v617 = vpop.permute.xlu0 %616
    %618 = vrot.lane.b32.xlu0 %v583, 2
    %v619 = vpop.permute.xlu0 %618
    %632 = vst.msk [vmem:[#allocation3 + $0x2] sm:$0xff] %vm267, %v597
    %633 = vst.msk [vmem:[#allocation3 + $0xa] sm:$0xff] %vm267, %v599
    %634 = vst.msk [vmem:[#allocation3 + $0x1a] sm:$0xff] %vm267, %v601
    %635 = vst.msk [vmem:[#allocation3 + $0x22] sm:$0xff] %vm267, %v603
    %636 = vst.msk [vmem:[#allocation3 + $0x32] sm:$0xff] %vm267, %v605
    %637 = vst.msk [vmem:[#allocation3 + $0x3a] sm:$0xff] %vm267, %v607
    %638 = vst.msk [vmem:[#allocation3 + $0x4a] sm:$0xff] %vm267, %v609
    %639 = vst.msk [vmem:[#allocation3 + $0x52] sm:$0xff] %vm267, %v611
    %640 = vst.msk [vmem:[#allocation3 + $0x62] sm:$0xff] %vm267, %v613
    %641 = vst.msk [vmem:[#allocation3 + $0x6a] sm:$0xff] %vm267, %v615
    %642 = vst.msk [vmem:[#allocation3 + $0x7a] sm:$0xff] %vm267, %v617
    %643 = vst.msk [vmem:[#allocation3 + $0x82] sm:$0xff] %vm267, %v619
    %644 = vrot.lane.b32.xlu0 %v572, 126
    %v645 = vpop.permute.xlu0 %644
    %646 = vrot.lane.b32.xlu0 %v573, 126
    %v647 = vpop.permute.xlu0 %646
    %648 = vrot.lane.b32.xlu0 %v574, 126
    %v649 = vpop.permute.xlu0 %648
    %650 = vrot.lane.b32.xlu0 %v575, 126
    %v651 = vpop.permute.xlu0 %650
    %652 = vrot.lane.b32.xlu0 %v576, 126
    %v653 = vpop.permute.xlu0 %652
    %654 = vrot.lane.b32.xlu0 %v577, 126
    %v655 = vpop.permute.xlu0 %654
    %656 = vrot.lane.b32.xlu0 %v578, 126
    %v657 = vpop.permute.xlu0 %656
    %658 = vrot.lane.b32.xlu0 %v579, 126
    %v659 = vpop.permute.xlu0 %658
    %660 = vrot.lane.b32.xlu0 %v580, 126
    %v661 = vpop.permute.xlu0 %660
    %662 = vrot.lane.b32.xlu0 %v581, 126
    %v663 = vpop.permute.xlu0 %662
    %664 = vrot.lane.b32.xlu0 %v582, 126
    %v665 = vpop.permute.xlu0 %664
    %666 = vrot.lane.b32.xlu0 %v583, 126
    %v667 = vpop.permute.xlu0 %666
    %680 = vst.msk [vmem:[#allocation3 + $0x2] sm:$0xff] %vm316, %v645
    %681 = vst.msk [vmem:[#allocation3 + $0xa] sm:$0xff] %vm316, %v647
    %682 = vst.msk [vmem:[#allocation3 + $0x1a] sm:$0xff] %vm316, %v649
    %683 = vst.msk [vmem:[#allocation3 + $0x22] sm:$0xff] %vm316, %v651
    %684 = vst.msk [vmem:[#allocation3 + $0x32] sm:$0xff] %vm316, %v653
    %685 = vst.msk [vmem:[#allocation3 + $0x3a] sm:$0xff] %vm316, %v655
    %686 = vst.msk [vmem:[#allocation3 + $0x4a] sm:$0xff] %vm316, %v657
    %687 = vst.msk [vmem:[#allocation3 + $0x52] sm:$0xff] %vm316, %v659
    %688 = vst.msk [vmem:[#allocation3 + $0x62] sm:$0xff] %vm316, %v661
    %689 = vst.msk [vmem:[#allocation3 + $0x6a] sm:$0xff] %vm316, %v663
    %690 = vst.msk [vmem:[#allocation3 + $0x7a] sm:$0xff] %vm316, %v665
    %691 = vst.msk [vmem:[#allocation3 + $0x82] sm:$0xff] %vm316, %v667
    %692 = vst.msk [vmem:[#allocation3 + $0x2] sm:$0xff] %vm329, %v572
    %693 = vst.msk [vmem:[#allocation3 + $0xa] sm:$0xff] %vm329, %v573
    %694 = vst.msk [vmem:[#allocation3 + $0x1a] sm:$0xff] %vm329, %v574
    %695 = vst.msk [vmem:[#allocation3 + $0x22] sm:$0xff] %vm329, %v575
    %696 = vst.msk [vmem:[#allocation3 + $0x32] sm:$0xff] %vm329, %v576
    %697 = vst.msk [vmem:[#allocation3 + $0x3a] sm:$0xff] %vm329, %v577
    %698 = vst.msk [vmem:[#allocation3 + $0x4a] sm:$0xff] %vm329, %v578
    %699 = vst.msk [vmem:[#allocation3 + $0x52] sm:$0xff] %vm329, %v579
    %700 = vst.msk [vmem:[#allocation3 + $0x62] sm:$0xff] %vm329, %v580
    %701 = vst.msk [vmem:[#allocation3 + $0x6a] sm:$0xff] %vm329, %v581
    %702 = vst.msk [vmem:[#allocation3 + $0x7a] sm:$0xff] %vm329, %v582
    %703 = vst.msk [vmem:[#allocation3 + $0x82] sm:$0xff] %vm329, %v583
    %704 = vrot.lane.b32.xlu0 %v572, 4
    %v705 = vpop.permute.xlu0 %704
    %706 = vrot.lane.b32.xlu0 %v573, 4
    %v707 = vpop.permute.xlu0 %706
    %708 = vrot.lane.b32.xlu0 %v574, 4
    %v709 = vpop.permute.xlu0 %708
    %710 = vrot.lane.b32.xlu0 %v575, 4
    %v711 = vpop.permute.xlu0 %710
    %712 = vrot.lane.b32.xlu0 %v576, 4
    %v713 = vpop.permute.xlu0 %712
    %714 = vrot.lane.b32.xlu0 %v577, 4
    %v715 = vpop.permute.xlu0 %714
    %716 = vrot.lane.b32.xlu0 %v578, 4
    %v717 = vpop.permute.xlu0 %716
    %718 = vrot.lane.b32.xlu0 %v579, 4
    %v719 = vpop.permute.xlu0 %718
    %720 = vrot.lane.b32.xlu0 %v580, 4
    %v721 = vpop.permute.xlu0 %720
    %722 = vrot.lane.b32.xlu0 %v581, 4
    %v723 = vpop.permute.xlu0 %722
    %724 = vrot.lane.b32.xlu0 %v582, 4
    %v725 = vpop.permute.xlu0 %724
    %726 = vrot.lane.b32.xlu0 %v583, 4
    %v727 = vpop.permute.xlu0 %726
    %740 = vst.msk [vmem:[#allocation3 + $0x2] sm:$0xff] %vm378, %v705
    %741 = vst.msk [vmem:[#allocation3 + $0xa] sm:$0xff] %vm378, %v707
    %742 = vst.msk [vmem:[#allocation3 + $0x1a] sm:$0xff] %vm378, %v709
    %743 = vst.msk [vmem:[#allocation3 + $0x22] sm:$0xff] %vm378, %v711
    %744 = vst.msk [vmem:[#allocation3 + $0x32] sm:$0xff] %vm378, %v713
    %745 = vst.msk [vmem:[#allocation3 + $0x3a] sm:$0xff] %vm378, %v715
    %746 = vst.msk [vmem:[#allocation3 + $0x4a] sm:$0xff] %vm378, %v717
    %747 = vst.msk [vmem:[#allocation3 + $0x52] sm:$0xff] %vm378, %v719
    %748 = vst.msk [vmem:[#allocation3 + $0x62] sm:$0xff] %vm378, %v721
    %749 = vst.msk [vmem:[#allocation3 + $0x6a] sm:$0xff] %vm378, %v723
    %750 = vst.msk [vmem:[#allocation3 + $0x7a] sm:$0xff] %vm378, %v725
    %751 = vst.msk [vmem:[#allocation3 + $0x82] sm:$0xff] %vm378, %v727
    %752 = vrot.lane.b32.xlu0 %v572, 6
    %v753 = vpop.permute.xlu0 %752
    %754 = vrot.lane.b32.xlu0 %v573, 6
    %v755 = vpop.permute.xlu0 %754
    %756 = vrot.lane.b32.xlu0 %v574, 6
    %v757 = vpop.permute.xlu0 %756
    %758 = vrot.lane.b32.xlu0 %v575, 6
    %v759 = vpop.permute.xlu0 %758
    %760 = vrot.lane.b32.xlu0 %v576, 6
    %v761 = vpop.permute.xlu0 %760
    %762 = vrot.lane.b32.xlu0 %v577, 6
    %v763 = vpop.permute.xlu0 %762
    %764 = vrot.lane.b32.xlu0 %v578, 6
    %v765 = vpop.permute.xlu0 %764
    %766 = vrot.lane.b32.xlu0 %v579, 6
    %v767 = vpop.permute.xlu0 %766
    %768 = vrot.lane.b32.xlu0 %v580, 6
    %v769 = vpop.permute.xlu0 %768
    %770 = vrot.lane.b32.xlu0 %v581, 6
    %v771 = vpop.permute.xlu0 %770
    %772 = vrot.lane.b32.xlu0 %v582, 6
    %v773 = vpop.permute.xlu0 %772
    %774 = vrot.lane.b32.xlu0 %v583, 6
    %v775 = vpop.permute.xlu0 %774
    %788 = vst.msk [vmem:[#allocation3 + $0x2] sm:$0xff] %vm427, %v753
    %789 = vst.msk [vmem:[#allocation3 + $0xa] sm:$0xff] %vm427, %v755
    %790 = vst.msk [vmem:[#allocation3 + $0x1a] sm:$0xff] %vm427, %v757
    %791 = vst.msk [vmem:[#allocation3 + $0x22] sm:$0xff] %vm427, %v759
    %792 = vst.msk [vmem:[#allocation3 + $0x32] sm:$0xff] %vm427, %v761
    %793 = vst.msk [vmem:[#allocation3 + $0x3a] sm:$0xff] %vm427, %v763
    %794 = vst.msk [vmem:[#allocation3 + $0x4a] sm:$0xff] %vm427, %v765
    %795 = vst.msk [vmem:[#allocation3 + $0x52] sm:$0xff] %vm427, %v767
    %796 = vst.msk [vmem:[#allocation3 + $0x62] sm:$0xff] %vm427, %v769
    %797 = vst.msk [vmem:[#allocation3 + $0x6a] sm:$0xff] %vm427, %v771
    %798 = vst.msk [vmem:[#allocation3 + $0x7a] sm:$0xff] %vm427, %v773
    %799 = vst.msk [vmem:[#allocation3 + $0x82] sm:$0xff] %vm427, %v775
    %v800 = vld [vmem:[#allocation3 + $0x4] sm:$0x1]
    %v801 = vld [vmem:[#allocation3 + $0x1c] sm:$0x1]
    %v802 = vld [vmem:[#allocation3 + $0x34] sm:$0x1]
    %v803 = vld [vmem:[#allocation3 + $0x4c] sm:$0x1]
    %v804 = vld [vmem:[#allocation3 + $0x64] sm:$0x1]
    %v805 = vld [vmem:[#allocation3 + $0x7c] sm:$0x1]
    %806 = vst [vmem:[#allocation3] sm:$0x1] %v800
    %807 = vst [vmem:[#allocation3 + $0x18] sm:$0x1] %v801
    %808 = vst [vmem:[#allocation3 + $0x30] sm:$0x1] %v802
    %809 = vst [vmem:[#allocation3 + $0x48] sm:$0x1] %v803
    %810 = vst [vmem:[#allocation3 + $0x60] sm:$0x1] %v804
    %811 = vst [vmem:[#allocation3 + $0x78] sm:$0x1] %v805
    %v812 = vld [vmem:[#allocation3 + $0x3] sm:$0x1]
    %v813 = vld [vmem:[#allocation3 + $0x1b] sm:$0x1]
    %v814 = vld [vmem:[#allocation3 + $0x33] sm:$0x1]
    %v815 = vld [vmem:[#allocation3 + $0x4b] sm:$0x1]
    %v816 = vld [vmem:[#allocation3 + $0x63] sm:$0x1]
    %v817 = vld [vmem:[#allocation3 + $0x7b] sm:$0x1]
    %818 = vst [vmem:[#allocation3 + $0x1] sm:$0x1] %v812
    %819 = vst [vmem:[#allocation3 + $0x19] sm:$0x1] %v813
    %820 = vst [vmem:[#allocation3 + $0x31] sm:$0x1] %v814
    %821 = vst [vmem:[#allocation3 + $0x49] sm:$0x1] %v815
    %822 = vst [vmem:[#allocation3 + $0x61] sm:$0x1] %v816
    %823 = vst [vmem:[#allocation3 + $0x79] sm:$0x1] %v817
    %v824 = vld [vmem:[#allocation3 + $0x10] sm:$0x1]
    %v825 = vld [vmem:[#allocation3 + $0x28] sm:$0x1]
    %v826 = vld [vmem:[#allocation3 + $0x40] sm:$0x1]
    %v827 = vld [vmem:[#allocation3 + $0x58] sm:$0x1]
    %v828 = vld [vmem:[#allocation3 + $0x70] sm:$0x1]
    %v829 = vld [vmem:[#allocation3 + $0x88] sm:$0x1]
    %830 = vst [vmem:[#allocation3 + $0x12] sm:$0x1] %v824
    %831 = vst [vmem:[#allocation3 + $0x2a] sm:$0x1] %v825
    %832 = vst [vmem:[#allocation3 + $0x42] sm:$0x1] %v826
    %833 = vst [vmem:[#allocation3 + $0x5a] sm:$0x1] %v827
    %834 = vst [vmem:[#allocation3 + $0x72] sm:$0x1] %v828
    %835 = vst [vmem:[#allocation3 + $0x8a] sm:$0x1] %v829
    %v836 = vld [vmem:[#allocation3 + $0xf] sm:$0x1]
    %v837 = vld [vmem:[#allocation3 + $0x27] sm:$0x1]
    %v838 = vld [vmem:[#allocation3 + $0x3f] sm:$0x1]
    %v839 = vld [vmem:[#allocation3 + $0x57] sm:$0x1]
    %v840 = vld [vmem:[#allocation3 + $0x6f] sm:$0x1]
    %v841 = vld [vmem:[#allocation3 + $0x87] sm:$0x1]
    %842 = vst [vmem:[#allocation3 + $0x13] sm:$0x1] %v836
    %843 = vst [vmem:[#allocation3 + $0x2b] sm:$0x1] %v837
    %844 = vst [vmem:[#allocation3 + $0x43] sm:$0x1] %v838
    %845 = vst [vmem:[#allocation3 + $0x5b] sm:$0x1] %v839
    %846 = vst [vmem:[#allocation3 + $0x73] sm:$0x1] %v840
    %847 = vst [vmem:[#allocation3 + $0x8b] sm:$0x1] %v841
    %v848 = vld [vmem:[#allocation2] sm:$0xff]
    %v849 = vld [vmem:[#allocation2 + $0x8] sm:$0xff]
    %v850 = vld [vmem:[#allocation2 + $0x10] sm:$0xff]
    %v851 = vld [vmem:[#allocation2 + $0x18] sm:$0xff]
    %v852 = vld [vmem:[#allocation2 + $0x20] sm:$0xff]
    %v853 = vld [vmem:[#allocation2 + $0x28] sm:$0xff]
    %v854 = vld [vmem:[#allocation2 + $0x30] sm:$0xff]
    %v855 = vld [vmem:[#allocation2 + $0x38] sm:$0xff]
    %v856 = vld [vmem:[#allocation2 + $0x40] sm:$0xff]
    %v857 = vld [vmem:[#allocation2 + $0x48] sm:$0xff]
    %v858 = vld [vmem:[#allocation2 + $0x50] sm:$0xff]
    %v859 = vld [vmem:[#allocation2 + $0x58] sm:$0xff]
    %v860 = vld [vmem:[#allocation2 + $0x60] sm:$0xff]
    %v861 = vld [vmem:[#allocation2 + $0x68] sm:$0xff]
    %v862 = vld [vmem:[#allocation2 + $0x70] sm:$0xff]
    %v863 = vld [vmem:[#allocation2 + $0x78] sm:$0xff]
    %v864 = vld [vmem:[#allocation2 + $0x80] sm:$0xff]
    %v865 = vld [vmem:[#allocation2 + $0x88] sm:$0xff]
    %866 = vrot.lane.b32.xlu0 %v848, 127
    %v867 = vpop.permute.xlu0 %866
    %868 = vrot.lane.b32.xlu0 %v849, 127
    %v869 = vpop.permute.xlu0 %868
    %870 = vrot.lane.b32.xlu0 %v850, 127
    %v871 = vpop.permute.xlu0 %870
    %872 = vrot.lane.b32.xlu0 %v851, 127
    %v873 = vpop.permute.xlu0 %872
    %874 = vrot.lane.b32.xlu0 %v852, 127
    %v875 = vpop.permute.xlu0 %874
    %876 = vrot.lane.b32.xlu0 %v853, 127
    %v877 = vpop.permute.xlu0 %876
    %878 = vrot.lane.b32.xlu0 %v854, 127
    %v879 = vpop.permute.xlu0 %878
    %880 = vrot.lane.b32.xlu0 %v855, 127
    %v881 = vpop.permute.xlu0 %880
    %882 = vrot.lane.b32.xlu0 %v856, 127
    %v883 = vpop.permute.xlu0 %882
    %884 = vrot.lane.b32.xlu0 %v857, 127
    %v885 = vpop.permute.xlu0 %884
    %886 = vrot.lane.b32.xlu0 %v858, 127
    %v887 = vpop.permute.xlu0 %886
    %888 = vrot.lane.b32.xlu0 %v859, 127
    %v889 = vpop.permute.xlu0 %888
    %890 = vrot.lane.b32.xlu0 %v860, 127
    %v891 = vpop.permute.xlu0 %890
    %892 = vrot.lane.b32.xlu0 %v861, 127
    %v893 = vpop.permute.xlu0 %892
    %894 = vrot.lane.b32.xlu0 %v862, 127
    %v895 = vpop.permute.xlu0 %894
    %896 = vrot.lane.b32.xlu0 %v863, 127
    %v897 = vpop.permute.xlu0 %896
    %898 = vrot.lane.b32.xlu0 %v864, 127
    %v899 = vpop.permute.xlu0 %898
    %900 = vrot.lane.b32.xlu0 %v865, 127
    %v901 = vpop.permute.xlu0 %900
    %v902 = vadd.f32 %v848, %v867
    %v903 = vadd.f32 %v849, %v869
    %v904 = vadd.f32 %v850, %v871
    %v905 = vadd.f32 %v851, %v873
    %v906 = vadd.f32 %v852, %v875
    %v907 = vadd.f32 %v853, %v877
    %v908 = vadd.f32 %v854, %v879
    %v909 = vadd.f32 %v855, %v881
    %v910 = vadd.f32 %v856, %v883
    %v911 = vadd.f32 %v857, %v885
    %v912 = vadd.f32 %v858, %v887
    %v913 = vadd.f32 %v859, %v889
    %v914 = vadd.f32 %v860, %v891
    %v915 = vadd.f32 %v861, %v893
    %v916 = vadd.f32 %v862, %v895
    %v917 = vadd.f32 %v863, %v897
    %v918 = vadd.f32 %v864, %v899
    %v919 = vadd.f32 %v865, %v901
    %920 = vrot.lane.b32.xlu0 %v848, 126
    %v921 = vpop.permute.xlu0 %920
    %922 = vrot.lane.b32.xlu0 %v849, 126
    %v923 = vpop.permute.xlu0 %922
    %924 = vrot.lane.b32.xlu0 %v850, 126
    %v925 = vpop.permute.xlu0 %924
    %926 = vrot.lane.b32.xlu0 %v851, 126
    %v927 = vpop.permute.xlu0 %926
    %928 = vrot.lane.b32.xlu0 %v852, 126
    %v929 = vpop.permute.xlu0 %928
    %930 = vrot.lane.b32.xlu0 %v853, 126
    %v931 = vpop.permute.xlu0 %930
    %932 = vrot.lane.b32.xlu0 %v854, 126
    %v933 = vpop.permute.xlu0 %932
    %934 = vrot.lane.b32.xlu0 %v855, 126
    %v935 = vpop.permute.xlu0 %934
    %936 = vrot.lane.b32.xlu0 %v856, 126
    %v937 = vpop.permute.xlu0 %936
    %938 = vrot.lane.b32.xlu0 %v857, 126
    %v939 = vpop.permute.xlu0 %938
    %940 = vrot.lane.b32.xlu0 %v858, 126
    %v941 = vpop.permute.xlu0 %940
    %942 = vrot.lane.b32.xlu0 %v859, 126
    %v943 = vpop.permute.xlu0 %942
    %944 = vrot.lane.b32.xlu0 %v860, 126
    %v945 = vpop.permute.xlu0 %944
    %946 = vrot.lane.b32.xlu0 %v861, 126
    %v947 = vpop.permute.xlu0 %946
    %948 = vrot.lane.b32.xlu0 %v862, 126
    %v949 = vpop.permute.xlu0 %948
    %950 = vrot.lane.b32.xlu0 %v863, 126
    %v951 = vpop.permute.xlu0 %950
    %952 = vrot.lane.b32.xlu0 %v864, 126
    %v953 = vpop.permute.xlu0 %952
    %954 = vrot.lane.b32.xlu0 %v865, 126
    %v955 = vpop.permute.xlu0 %954
    %v956 = vadd.f32 %v902, %v921
    %v957 = vadd.f32 %v903, %v923
    %v958 = vadd.f32 %v904, %v925
    %v959 = vadd.f32 %v905, %v927
    %v960 = vadd.f32 %v906, %v929
    %v961 = vadd.f32 %v907, %v931
    %v962 = vadd.f32 %v908, %v933
    %v963 = vadd.f32 %v909, %v935
    %v964 = vadd.f32 %v910, %v937
    %v965 = vadd.f32 %v911, %v939
    %v966 = vadd.f32 %v912, %v941
    %v967 = vadd.f32 %v913, %v943
    %v968 = vadd.f32 %v914, %v945
    %v969 = vadd.f32 %v915, %v947
    %v970 = vadd.f32 %v916, %v949
    %v971 = vadd.f32 %v917, %v951
    %v972 = vadd.f32 %v918, %v953
    %v973 = vadd.f32 %v919, %v955
    %v974 = vrot.slane %v956, 1
    %v975 = vrot.slane %v959, 1
    %v976 = vrot.slane %v962, 1
    %v977 = vrot.slane %v965, 1
    %v978 = vrot.slane %v968, 1
    %v979 = vrot.slane %v971, 1
    %v980 = vrot.slane %v957, 1
    %v981 = vrot.slane %v960, 1
    %v982 = vrot.slane %v963, 1
    %v983 = vrot.slane %v966, 1
    %v984 = vrot.slane %v969, 1
    %v985 = vrot.slane %v972, 1
    %v986 = vrot.slane %v958, 1
    %v987 = vrot.slane %v961, 1
    %v988 = vrot.slane %v964, 1
    %v989 = vrot.slane %v967, 1
    %v990 = vrot.slane %v970, 1
    %v991 = vrot.slane %v973, 1
    %v992 = vlaneseq
    %v993 = vshrl.u32 %v992, 7
    %vm994 = vcmp.lt.s32.totalorder %v993, 7
    %v995 = vsel %vm994, %v980, %v986
    %v996 = vsel %vm994, %v981, %v987
    %v997 = vsel %vm994, %v982, %v988
    %v998 = vsel %vm994, %v983, %v989
    %v999 = vsel %vm994, %v984, %v990
    %v1000 = vsel %vm994, %v985, %v991
    %v1001 = vsel %vm994, %v974, %v980
    %v1002 = vsel %vm994, %v975, %v981
    %v1003 = vsel %vm994, %v976, %v982
    %v1004 = vsel %vm994, %v977, %v983
    %v1005 = vsel %vm994, %v978, %v984
    %v1006 = vsel %vm994, %v979, %v985
    %v1007 = vsel %vm994, %v986, %v974
    %v1008 = vsel %vm994, %v987, %v975
    %v1009 = vsel %vm994, %v988, %v976
    %v1010 = vsel %vm994, %v989, %v977
    %v1011 = vsel %vm994, %v990, %v978
    %v1012 = vsel %vm994, %v991, %v979
    %v1013 = vadd.f32 %v956, %v1001
    %v1014 = vadd.f32 %v957, %v995
    %v1015 = vadd.f32 %v958, %v1007
    %v1016 = vadd.f32 %v959, %v1002
    %v1017 = vadd.f32 %v960, %v996
    %v1018 = vadd.f32 %v961, %v1008
    %v1019 = vadd.f32 %v962, %v1003
    %v1020 = vadd.f32 %v963, %v997
    %v1021 = vadd.f32 %v964, %v1009
    %v1022 = vadd.f32 %v965, %v1004
    %v1023 = vadd.f32 %v966, %v998
    %v1024 = vadd.f32 %v967, %v1010
    %v1025 = vadd.f32 %v968, %v1005
    %v1026 = vadd.f32 %v969, %v999
    %v1027 = vadd.f32 %v970, %v1011
    %v1028 = vadd.f32 %v971, %v1006
    %v1029 = vadd.f32 %v972, %v1000
    %v1030 = vadd.f32 %v973, %v1012
    %v1031 = vrot.slane %v956, 2
    %v1032 = vrot.slane %v959, 2
    %v1033 = vrot.slane %v962, 2
    %v1034 = vrot.slane %v965, 2
    %v1035 = vrot.slane %v968, 2
    %v1036 = vrot.slane %v971, 2
    %v1037 = vrot.slane %v957, 2
    %v1038 = vrot.slane %v960, 2
    %v1039 = vrot.slane %v963, 2
    %v1040 = vrot.slane %v966, 2
    %v1041 = vrot.slane %v969, 2
    %v1042 = vrot.slane %v972, 2
    %v1043 = vrot.slane %v958, 2
    %v1044 = vrot.slane %v961, 2
    %v1045 = vrot.slane %v964, 2
    %v1046 = vrot.slane %v967, 2
    %v1047 = vrot.slane %v970, 2
    %v1048 = vrot.slane %v973, 2
    %vm1049 = vcmp.lt.s32.totalorder %v993, 6
    %v1050 = vsel %vm1049, %v1037, %v1043
    %v1051 = vsel %vm1049, %v1038, %v1044
    %v1052 = vsel %vm1049, %v1039, %v1045
    %v1053 = vsel %vm1049, %v1040, %v1046
    %v1054 = vsel %vm1049, %v1041, %v1047
    %v1055 = vsel %vm1049, %v1042, %v1048
    %v1056 = vsel %vm1049, %v1031, %v1037
    %v1057 = vsel %vm1049, %v1032, %v1038
    %v1058 = vsel %vm1049, %v1033, %v1039
    %v1059 = vsel %vm1049, %v1034, %v1040
    %v1060 = vsel %vm1049, %v1035, %v1041
    %v1061 = vsel %vm1049, %v1036, %v1042
    %v1062 = vsel %vm1049, %v1043, %v1031
    %v1063 = vsel %vm1049, %v1044, %v1032
    %v1064 = vsel %vm1049, %v1045, %v1033
    %v1065 = vsel %vm1049, %v1046, %v1034
    %v1066 = vsel %vm1049, %v1047, %v1035
    %v1067 = vsel %vm1049, %v1048, %v1036
    %v1068 = vadd.f32 %v1013, %v1056
    %v1069 = vadd.f32 %v1014, %v1050
    %v1070 = vadd.f32 %v1015, %v1062
    %v1071 = vadd.f32 %v1016, %v1057
    %v1072 = vadd.f32 %v1017, %v1051
    %v1073 = vadd.f32 %v1018, %v1063
    %v1074 = vadd.f32 %v1019, %v1058
    %v1075 = vadd.f32 %v1020, %v1052
    %v1076 = vadd.f32 %v1021, %v1064
    %v1077 = vadd.f32 %v1022, %v1059
    %v1078 = vadd.f32 %v1023, %v1053
    %v1079 = vadd.f32 %v1024, %v1065
    %v1080 = vadd.f32 %v1025, %v1060
    %v1081 = vadd.f32 %v1026, %v1054
    %v1082 = vadd.f32 %v1027, %v1066
    %v1083 = vadd.f32 %v1028, %v1061
    %v1084 = vadd.f32 %v1029, %v1055
    %v1085 = vadd.f32 %v1030, %v1067
    %v1086 = vrot.slane %v867, 1
    %v1087 = vrot.slane %v873, 1
    %v1088 = vrot.slane %v879, 1
    %v1089 = vrot.slane %v885, 1
    %v1090 = vrot.slane %v891, 1
    %v1091 = vrot.slane %v897, 1
    %v1092 = vrot.slane %v869, 1
    %v1093 = vrot.slane %v875, 1
    %v1094 = vrot.slane %v881, 1
    %v1095 = vrot.slane %v887, 1
    %v1096 = vrot.slane %v893, 1
    %v1097 = vrot.slane %v899, 1
    %v1098 = vrot.slane %v871, 1
    %v1099 = vrot.slane %v877, 1
    %v1100 = vrot.slane %v883, 1
    %v1101 = vrot.slane %v889, 1
    %v1102 = vrot.slane %v895, 1
    %v1103 = vrot.slane %v901, 1
    %v1104 = vsel %vm994, %v1092, %v1098
    %v1105 = vsel %vm994, %v1093, %v1099
    %v1106 = vsel %vm994, %v1094, %v1100
    %v1107 = vsel %vm994, %v1095, %v1101
    %v1108 = vsel %vm994, %v1096, %v1102
    %v1109 = vsel %vm994, %v1097, %v1103
    %v1110 = vsel %vm994, %v1086, %v1092
    %v1111 = vsel %vm994, %v1087, %v1093
    %v1112 = vsel %vm994, %v1088, %v1094
    %v1113 = vsel %vm994, %v1089, %v1095
    %v1114 = vsel %vm994, %v1090, %v1096
    %v1115 = vsel %vm994, %v1091, %v1097
    %v1116 = vsel %vm994, %v1098, %v1086
    %v1117 = vsel %vm994, %v1099, %v1087
    %v1118 = vsel %vm994, %v1100, %v1088
    %v1119 = vsel %vm994, %v1101, %v1089
    %v1120 = vsel %vm994, %v1102, %v1090
    %v1121 = vsel %vm994, %v1103, %v1091
    %v1122 = vmul.f32 %v1110, 9.0
    %v1123 = vmul.f32 %v1104, 9.0
    %v1124 = vmul.f32 %v1116, 9.0
    %v1125 = vmul.f32 %v1111, 9.0
    %v1126 = vmul.f32 %v1105, 9.0
    %v1127 = vmul.f32 %v1117, 9.0
    %v1128 = vmul.f32 %v1112, 9.0
    %v1129 = vmul.f32 %v1106, 9.0
    %v1130 = vmul.f32 %v1118, 9.0
    %v1131 = vmul.f32 %v1113, 9.0
    %v1132 = vmul.f32 %v1107, 9.0
    %v1133 = vmul.f32 %v1119, 9.0
    %v1134 = vmul.f32 %v1114, 9.0
    %v1135 = vmul.f32 %v1108, 9.0
    %v1136 = vmul.f32 %v1120, 9.0
    %v1137 = vmul.f32 %v1115, 9.0
    %v1138 = vmul.f32 %v1109, 9.0
    %v1139 = vmul.f32 %v1121, 9.0
    %v1140 = vsub.f32 %v1122, %v1068
    %v1141 = vsub.f32 %v1123, %v1069
    %v1142 = vsub.f32 %v1124, %v1070
    %v1143 = vsub.f32 %v1125, %v1071
    %v1144 = vsub.f32 %v1126, %v1072
    %v1145 = vsub.f32 %v1127, %v1073
    %v1146 = vsub.f32 %v1128, %v1074
    %v1147 = vsub.f32 %v1129, %v1075
    %v1148 = vsub.f32 %v1130, %v1076
    %v1149 = vsub.f32 %v1131, %v1077
    %v1150 = vsub.f32 %v1132, %v1078
    %v1151 = vsub.f32 %v1133, %v1079
    %v1152 = vsub.f32 %v1134, %v1080
    %v1153 = vsub.f32 %v1135, %v1081
    %v1154 = vsub.f32 %v1136, %v1082
    %v1155 = vsub.f32 %v1137, %v1083
    %v1156 = vsub.f32 %v1138, %v1084
    %v1157 = vsub.f32 %v1139, %v1085
    %v1158 = vtanh.pop %v1140
    %v1159 = vtanh.pop %v1141
    %v1160 = vtanh.pop %v1142
    %v1161 = vtanh.pop %v1143
    %v1162 = vtanh.pop %v1144
    %v1163 = vtanh.pop %v1145
    %v1164 = vtanh.pop %v1146
    %v1165 = vtanh.pop %v1147
    %v1166 = vtanh.pop %v1148
    %v1167 = vtanh.pop %v1149
    %v1168 = vtanh.pop %v1150
    %v1169 = vtanh.pop %v1151
    %v1170 = vtanh.pop %v1152
    %v1171 = vtanh.pop %v1153
    %v1172 = vtanh.pop %v1154
    %v1173 = vtanh.pop %v1155
    %v1174 = vtanh.pop %v1156
    %v1175 = vtanh.pop %v1157
    %v1176 = vand.u32 2147483647, %v1158
    %v1177 = vand.u32 2147483647, %v1159
    %v1178 = vand.u32 2147483647, %v1160
    %v1179 = vand.u32 2147483647, %v1161
    %v1180 = vand.u32 2147483647, %v1162
    %v1181 = vand.u32 2147483647, %v1163
    %v1182 = vand.u32 2147483647, %v1164
    %v1183 = vand.u32 2147483647, %v1165
    %v1184 = vand.u32 2147483647, %v1166
    %v1185 = vand.u32 2147483647, %v1167
    %v1186 = vand.u32 2147483647, %v1168
    %v1187 = vand.u32 2147483647, %v1169
    %v1188 = vand.u32 2147483647, %v1170
    %v1189 = vand.u32 2147483647, %v1171
    %v1190 = vand.u32 2147483647, %v1172
    %v1191 = vand.u32 2147483647, %v1173
    %v1192 = vand.u32 2147483647, %v1174
    %v1193 = vand.u32 2147483647, %v1175
    %v1194 = vld [vmem:[#allocation3] sm:$0xff]
    %v1195 = vld [vmem:[#allocation3 + $0x8] sm:$0xff]
    %v1196 = vld [vmem:[#allocation3 + $0x10] sm:$0xff]
    %v1197 = vld [vmem:[#allocation3 + $0x18] sm:$0xff]
    %v1198 = vld [vmem:[#allocation3 + $0x20] sm:$0xff]
    %v1199 = vld [vmem:[#allocation3 + $0x28] sm:$0xff]
    %v1200 = vld [vmem:[#allocation3 + $0x30] sm:$0xff]
    %v1201 = vld [vmem:[#allocation3 + $0x38] sm:$0xff]
    %v1202 = vld [vmem:[#allocation3 + $0x40] sm:$0xff]
    %v1203 = vld [vmem:[#allocation3 + $0x48] sm:$0xff]
    %v1204 = vld [vmem:[#allocation3 + $0x50] sm:$0xff]
    %v1205 = vld [vmem:[#allocation3 + $0x58] sm:$0xff]
    %v1206 = vld [vmem:[#allocation3 + $0x60] sm:$0xff]
    %v1207 = vld [vmem:[#allocation3 + $0x68] sm:$0xff]
    %v1208 = vld [vmem:[#allocation3 + $0x70] sm:$0xff]
    %v1209 = vld [vmem:[#allocation3 + $0x78] sm:$0xff]
    %v1210 = vld [vmem:[#allocation3 + $0x80] sm:$0xff]
    %v1211 = vld [vmem:[#allocation3 + $0x88] sm:$0xff]
    %1212 = vrot.lane.b32.xlu0 %v1194, 127
    %v1213 = vpop.permute.xlu0 %1212
    %1214 = vrot.lane.b32.xlu0 %v1195, 127
    %v1215 = vpop.permute.xlu0 %1214
    %1216 = vrot.lane.b32.xlu0 %v1196, 127
    %v1217 = vpop.permute.xlu0 %1216
    %1218 = vrot.lane.b32.xlu0 %v1197, 127
    %v1219 = vpop.permute.xlu0 %1218
    %1220 = vrot.lane.b32.xlu0 %v1198, 127
    %v1221 = vpop.permute.xlu0 %1220
    %1222 = vrot.lane.b32.xlu0 %v1199, 127
    %v1223 = vpop.permute.xlu0 %1222
    %1224 = vrot.lane.b32.xlu0 %v1200, 127
    %v1225 = vpop.permute.xlu0 %1224
    %1226 = vrot.lane.b32.xlu0 %v1201, 127
    %v1227 = vpop.permute.xlu0 %1226
    %1228 = vrot.lane.b32.xlu0 %v1202, 127
    %v1229 = vpop.permute.xlu0 %1228
    %1230 = vrot.lane.b32.xlu0 %v1203, 127
    %v1231 = vpop.permute.xlu0 %1230
    %1232 = vrot.lane.b32.xlu0 %v1204, 127
    %v1233 = vpop.permute.xlu0 %1232
    %1234 = vrot.lane.b32.xlu0 %v1205, 127
    %v1235 = vpop.permute.xlu0 %1234
    %1236 = vrot.lane.b32.xlu0 %v1206, 127
    %v1237 = vpop.permute.xlu0 %1236
    %1238 = vrot.lane.b32.xlu0 %v1207, 127
    %v1239 = vpop.permute.xlu0 %1238
    %1240 = vrot.lane.b32.xlu0 %v1208, 127
    %v1241 = vpop.permute.xlu0 %1240
    %1242 = vrot.lane.b32.xlu0 %v1209, 127
    %v1243 = vpop.permute.xlu0 %1242
    %1244 = vrot.lane.b32.xlu0 %v1210, 127
    %v1245 = vpop.permute.xlu0 %1244
    %1246 = vrot.lane.b32.xlu0 %v1211, 127
    %v1247 = vpop.permute.xlu0 %1246
    %v1248 = vadd.f32 %v1194, %v1213
    %v1249 = vadd.f32 %v1195, %v1215
    %v1250 = vadd.f32 %v1196, %v1217
    %v1251 = vadd.f32 %v1197, %v1219
    %v1252 = vadd.f32 %v1198, %v1221
    %v1253 = vadd.f32 %v1199, %v1223
    %v1254 = vadd.f32 %v1200, %v1225
    %v1255 = vadd.f32 %v1201, %v1227
    %v1256 = vadd.f32 %v1202, %v1229
    %v1257 = vadd.f32 %v1203, %v1231
    %v1258 = vadd.f32 %v1204, %v1233
    %v1259 = vadd.f32 %v1205, %v1235
    %v1260 = vadd.f32 %v1206, %v1237
    %v1261 = vadd.f32 %v1207, %v1239
    %v1262 = vadd.f32 %v1208, %v1241
    %v1263 = vadd.f32 %v1209, %v1243
    %v1264 = vadd.f32 %v1210, %v1245
    %v1265 = vadd.f32 %v1211, %v1247
    %1266 = vrot.lane.b32.xlu0 %v1194, 126
    %v1267 = vpop.permute.xlu0 %1266
    %1268 = vrot.lane.b32.xlu0 %v1195, 126
    %v1269 = vpop.permute.xlu0 %1268
    %1270 = vrot.lane.b32.xlu0 %v1196, 126
    %v1271 = vpop.permute.xlu0 %1270
    %1272 = vrot.lane.b32.xlu0 %v1197, 126
    %v1273 = vpop.permute.xlu0 %1272
    %1274 = vrot.lane.b32.xlu0 %v1198, 126
    %v1275 = vpop.permute.xlu0 %1274
    %1276 = vrot.lane.b32.xlu0 %v1199, 126
    %v1277 = vpop.permute.xlu0 %1276
    %1278 = vrot.lane.b32.xlu0 %v1200, 126
    %v1279 = vpop.permute.xlu0 %1278
    %1280 = vrot.lane.b32.xlu0 %v1201, 126
    %v1281 = vpop.permute.xlu0 %1280
    %1282 = vrot.lane.b32.xlu0 %v1202, 126
    %v1283 = vpop.permute.xlu0 %1282
    %1284 = vrot.lane.b32.xlu0 %v1203, 126
    %v1285 = vpop.permute.xlu0 %1284
    %1286 = vrot.lane.b32.xlu0 %v1204, 126
    %v1287 = vpop.permute.xlu0 %1286
    %1288 = vrot.lane.b32.xlu0 %v1205, 126
    %v1289 = vpop.permute.xlu0 %1288
    %1290 = vrot.lane.b32.xlu0 %v1206, 126
    %v1291 = vpop.permute.xlu0 %1290
    %1292 = vrot.lane.b32.xlu0 %v1207, 126
    %v1293 = vpop.permute.xlu0 %1292
    %1294 = vrot.lane.b32.xlu0 %v1208, 126
    %v1295 = vpop.permute.xlu0 %1294
    %1296 = vrot.lane.b32.xlu0 %v1209, 126
    %v1297 = vpop.permute.xlu0 %1296
    %1298 = vrot.lane.b32.xlu0 %v1210, 126
    %v1299 = vpop.permute.xlu0 %1298
    %1300 = vrot.lane.b32.xlu0 %v1211, 126
    %v1301 = vpop.permute.xlu0 %1300
    %v1302 = vadd.f32 %v1248, %v1267
    %v1303 = vadd.f32 %v1249, %v1269
    %v1304 = vadd.f32 %v1250, %v1271
    %v1305 = vadd.f32 %v1251, %v1273
    %v1306 = vadd.f32 %v1252, %v1275
    %v1307 = vadd.f32 %v1253, %v1277
    %v1308 = vadd.f32 %v1254, %v1279
    %v1309 = vadd.f32 %v1255, %v1281
    %v1310 = vadd.f32 %v1256, %v1283
    %v1311 = vadd.f32 %v1257, %v1285
    %v1312 = vadd.f32 %v1258, %v1287
    %v1313 = vadd.f32 %v1259, %v1289
    %v1314 = vadd.f32 %v1260, %v1291
    %v1315 = vadd.f32 %v1261, %v1293
    %v1316 = vadd.f32 %v1262, %v1295
    %v1317 = vadd.f32 %v1263, %v1297
    %v1318 = vadd.f32 %v1264, %v1299
    %v1319 = vadd.f32 %v1265, %v1301
    %v1320 = vrot.slane %v1302, 1
    %v1321 = vrot.slane %v1305, 1
    %v1322 = vrot.slane %v1308, 1
    %v1323 = vrot.slane %v1311, 1
    %v1324 = vrot.slane %v1314, 1
    %v1325 = vrot.slane %v1317, 1
    %v1326 = vrot.slane %v1303, 1
    %v1327 = vrot.slane %v1306, 1
    %v1328 = vrot.slane %v1309, 1
    %v1329 = vrot.slane %v1312, 1
    %v1330 = vrot.slane %v1315, 1
    %v1331 = vrot.slane %v1318, 1
    %v1332 = vrot.slane %v1304, 1
    %v1333 = vrot.slane %v1307, 1
    %v1334 = vrot.slane %v1310, 1
    %v1335 = vrot.slane %v1313, 1
    %v1336 = vrot.slane %v1316, 1
    %v1337 = vrot.slane %v1319, 1
    %v1338 = vsel %vm994, %v1326, %v1332
    %v1339 = vsel %vm994, %v1327, %v1333
    %v1340 = vsel %vm994, %v1328, %v1334
    %v1341 = vsel %vm994, %v1329, %v1335
    %v1342 = vsel %vm994, %v1330, %v1336
    %v1343 = vsel %vm994, %v1331, %v1337
    %v1344 = vsel %vm994, %v1320, %v1326
    %v1345 = vsel %vm994, %v1321, %v1327
    %v1346 = vsel %vm994, %v1322, %v1328
    %v1347 = vsel %vm994, %v1323, %v1329
    %v1348 = vsel %vm994, %v1324, %v1330
    %v1349 = vsel %vm994, %v1325, %v1331
    %v1350 = vsel %vm994, %v1332, %v1320
    %v1351 = vsel %vm994, %v1333, %v1321
    %v1352 = vsel %vm994, %v1334, %v1322
    %v1353 = vsel %vm994, %v1335, %v1323
    %v1354 = vsel %vm994, %v1336, %v1324
    %v1355 = vsel %vm994, %v1337, %v1325
    %v1356 = vadd.f32 %v1302, %v1344
    %v1357 = vadd.f32 %v1303, %v1338
    %v1358 = vadd.f32 %v1304, %v1350
    %v1359 = vadd.f32 %v1305, %v1345
    %v1360 = vadd.f32 %v1306, %v1339
    %v1361 = vadd.f32 %v1307, %v1351
    %v1362 = vadd.f32 %v1308, %v1346
    %v1363 = vadd.f32 %v1309, %v1340
    %v1364 = vadd.f32 %v1310, %v1352
    %v1365 = vadd.f32 %v1311, %v1347
    %v1366 = vadd.f32 %v1312, %v1341
    %v1367 = vadd.f32 %v1313, %v1353
    %v1368 = vadd.f32 %v1314, %v1348
    %v1369 = vadd.f32 %v1315, %v1342
    %v1370 = vadd.f32 %v1316, %v1354
    %v1371 = vadd.f32 %v1317, %v1349
    %v1372 = vadd.f32 %v1318, %v1343
    %v1373 = vadd.f32 %v1319, %v1355
    %v1374 = vrot.slane %v1302, 2
    %v1375 = vrot.slane %v1305, 2
    %v1376 = vrot.slane %v1308, 2
    %v1377 = vrot.slane %v1311, 2
    %v1378 = vrot.slane %v1314, 2
    %v1379 = vrot.slane %v1317, 2
    %v1380 = vrot.slane %v1303, 2
    %v1381 = vrot.slane %v1306, 2
    %v1382 = vrot.slane %v1309, 2
    %v1383 = vrot.slane %v1312, 2
    %v1384 = vrot.slane %v1315, 2
    %v1385 = vrot.slane %v1318, 2
    %v1386 = vrot.slane %v1304, 2
    %v1387 = vrot.slane %v1307, 2
    %v1388 = vrot.slane %v1310, 2
    %v1389 = vrot.slane %v1313, 2
    %v1390 = vrot.slane %v1316, 2
    %v1391 = vrot.slane %v1319, 2
    %v1392 = vsel %vm1049, %v1380, %v1386
    %v1393 = vsel %vm1049, %v1381, %v1387
    %v1394 = vsel %vm1049, %v1382, %v1388
    %v1395 = vsel %vm1049, %v1383, %v1389
    %v1396 = vsel %vm1049, %v1384, %v1390
    %v1397 = vsel %vm1049, %v1385, %v1391
    %v1398 = vsel %vm1049, %v1374, %v1380
    %v1399 = vsel %vm1049, %v1375, %v1381
    %v1400 = vsel %vm1049, %v1376, %v1382
    %v1401 = vsel %vm1049, %v1377, %v1383
    %v1402 = vsel %vm1049, %v1378, %v1384
    %v1403 = vsel %vm1049, %v1379, %v1385
    %v1404 = vsel %vm1049, %v1386, %v1374
    %v1405 = vsel %vm1049, %v1387, %v1375
    %v1406 = vsel %vm1049, %v1388, %v1376
    %v1407 = vsel %vm1049, %v1389, %v1377
    %v1408 = vsel %vm1049, %v1390, %v1378
    %v1409 = vsel %vm1049, %v1391, %v1379
    %v1410 = vadd.f32 %v1356, %v1398
    %v1411 = vadd.f32 %v1357, %v1392
    %v1412 = vadd.f32 %v1358, %v1404
    %v1413 = vadd.f32 %v1359, %v1399
    %v1414 = vadd.f32 %v1360, %v1393
    %v1415 = vadd.f32 %v1361, %v1405
    %v1416 = vadd.f32 %v1362, %v1400
    %v1417 = vadd.f32 %v1363, %v1394
    %v1418 = vadd.f32 %v1364, %v1406
    %v1419 = vadd.f32 %v1365, %v1401
    %v1420 = vadd.f32 %v1366, %v1395
    %v1421 = vadd.f32 %v1367, %v1407
    %v1422 = vadd.f32 %v1368, %v1402
    %v1423 = vadd.f32 %v1369, %v1396
    %v1424 = vadd.f32 %v1370, %v1408
    %v1425 = vadd.f32 %v1371, %v1403
    %v1426 = vadd.f32 %v1372, %v1397
    %v1427 = vadd.f32 %v1373, %v1409
    %v1428 = vrot.slane %v1213, 1
    %v1429 = vrot.slane %v1219, 1
    %v1430 = vrot.slane %v1225, 1
    %v1431 = vrot.slane %v1231, 1
    %v1432 = vrot.slane %v1237, 1
    %v1433 = vrot.slane %v1243, 1
    %v1434 = vrot.slane %v1215, 1
    %v1435 = vrot.slane %v1221, 1
    %v1436 = vrot.slane %v1227, 1
    %v1437 = vrot.slane %v1233, 1
    %v1438 = vrot.slane %v1239, 1
    %v1439 = vrot.slane %v1245, 1
    %v1440 = vrot.slane %v1217, 1
    %v1441 = vrot.slane %v1223, 1
    %v1442 = vrot.slane %v1229, 1
    %v1443 = vrot.slane %v1235, 1
    %v1444 = vrot.slane %v1241, 1
    %v1445 = vrot.slane %v1247, 1
    %v1446 = vsel %vm994, %v1434, %v1440
    %v1447 = vsel %vm994, %v1435, %v1441
    %v1448 = vsel %vm994, %v1436, %v1442
    %v1449 = vsel %vm994, %v1437, %v1443
    %v1450 = vsel %vm994, %v1438, %v1444
    %v1451 = vsel %vm994, %v1439, %v1445
    %v1452 = vsel %vm994, %v1428, %v1434
    %v1453 = vsel %vm994, %v1429, %v1435
    %v1454 = vsel %vm994, %v1430, %v1436
    %v1455 = vsel %vm994, %v1431, %v1437
    %v1456 = vsel %vm994, %v1432, %v1438
    %v1457 = vsel %vm994, %v1433, %v1439
    %v1458 = vsel %vm994, %v1440, %v1428
    %v1459 = vsel %vm994, %v1441, %v1429
    %v1460 = vsel %vm994, %v1442, %v1430
    %v1461 = vsel %vm994, %v1443, %v1431
    %v1462 = vsel %vm994, %v1444, %v1432
    %v1463 = vsel %vm994, %v1445, %v1433
    %v1464 = vmul.f32 %v1452, 9.0
    %v1465 = vmul.f32 %v1446, 9.0
    %v1466 = vmul.f32 %v1458, 9.0
    %v1467 = vmul.f32 %v1453, 9.0
    %v1468 = vmul.f32 %v1447, 9.0
    %v1469 = vmul.f32 %v1459, 9.0
    %v1470 = vmul.f32 %v1454, 9.0
    %v1471 = vmul.f32 %v1448, 9.0
    %v1472 = vmul.f32 %v1460, 9.0
    %v1473 = vmul.f32 %v1455, 9.0
    %v1474 = vmul.f32 %v1449, 9.0
    %v1475 = vmul.f32 %v1461, 9.0
    %v1476 = vmul.f32 %v1456, 9.0
    %v1477 = vmul.f32 %v1450, 9.0
    %v1478 = vmul.f32 %v1462, 9.0
    %v1479 = vmul.f32 %v1457, 9.0
    %v1480 = vmul.f32 %v1451, 9.0
    %v1481 = vmul.f32 %v1463, 9.0
    %v1482 = vsub.f32 %v1464, %v1410
    %v1483 = vsub.f32 %v1465, %v1411
    %v1484 = vsub.f32 %v1466, %v1412
    %v1485 = vsub.f32 %v1467, %v1413
    %v1486 = vsub.f32 %v1468, %v1414
    %v1487 = vsub.f32 %v1469, %v1415
    %v1488 = vsub.f32 %v1470, %v1416
    %v1489 = vsub.f32 %v1471, %v1417
    %v1490 = vsub.f32 %v1472, %v1418
    %v1491 = vsub.f32 %v1473, %v1419
    %v1492 = vsub.f32 %v1474, %v1420
    %v1493 = vsub.f32 %v1475, %v1421
    %v1494 = vsub.f32 %v1476, %v1422
    %v1495 = vsub.f32 %v1477, %v1423
    %v1496 = vsub.f32 %v1478, %v1424
    %v1497 = vsub.f32 %v1479, %v1425
    %v1498 = vsub.f32 %v1480, %v1426
    %v1499 = vsub.f32 %v1481, %v1427
    %v1500 = vtanh.pop %v1482
    %v1501 = vtanh.pop %v1483
    %v1502 = vtanh.pop %v1484
    %v1503 = vtanh.pop %v1485
    %v1504 = vtanh.pop %v1486
    %v1505 = vtanh.pop %v1487
    %v1506 = vtanh.pop %v1488
    %v1507 = vtanh.pop %v1489
    %v1508 = vtanh.pop %v1490
    %v1509 = vtanh.pop %v1491
    %v1510 = vtanh.pop %v1492
    %v1511 = vtanh.pop %v1493
    %v1512 = vtanh.pop %v1494
    %v1513 = vtanh.pop %v1495
    %v1514 = vtanh.pop %v1496
    %v1515 = vtanh.pop %v1497
    %v1516 = vtanh.pop %v1498
    %v1517 = vtanh.pop %v1499
    %v1518 = vand.u32 2147483647, %v1500
    %v1519 = vand.u32 2147483647, %v1501
    %v1520 = vand.u32 2147483647, %v1502
    %v1521 = vand.u32 2147483647, %v1503
    %v1522 = vand.u32 2147483647, %v1504
    %v1523 = vand.u32 2147483647, %v1505
    %v1524 = vand.u32 2147483647, %v1506
    %v1525 = vand.u32 2147483647, %v1507
    %v1526 = vand.u32 2147483647, %v1508
    %v1527 = vand.u32 2147483647, %v1509
    %v1528 = vand.u32 2147483647, %v1510
    %v1529 = vand.u32 2147483647, %v1511
    %v1530 = vand.u32 2147483647, %v1512
    %v1531 = vand.u32 2147483647, %v1513
    %v1532 = vand.u32 2147483647, %v1514
    %v1533 = vand.u32 2147483647, %v1515
    %v1534 = vand.u32 2147483647, %v1516
    %v1535 = vand.u32 2147483647, %v1517
    %v1536 = vsub.f32 %v1176, %v1518
    %v1537 = vsub.f32 %v1177, %v1519
    %v1538 = vsub.f32 %v1178, %v1520
    %v1539 = vsub.f32 %v1179, %v1521
    %v1540 = vsub.f32 %v1180, %v1522
    %v1541 = vsub.f32 %v1181, %v1523
    %v1542 = vsub.f32 %v1182, %v1524
    %v1543 = vsub.f32 %v1183, %v1525
    %v1544 = vsub.f32 %v1184, %v1526
    %v1545 = vsub.f32 %v1185, %v1527
    %v1546 = vsub.f32 %v1186, %v1528
    %v1547 = vsub.f32 %v1187, %v1529
    %v1548 = vsub.f32 %v1188, %v1530
    %v1549 = vsub.f32 %v1189, %v1531
    %v1550 = vsub.f32 %v1190, %v1532
    %v1551 = vsub.f32 %v1191, %v1533
    %v1552 = vsub.f32 %v1192, %v1534
    %v1553 = vsub.f32 %v1193, %v1535
    %v1554 = vand.u32 2147483647, %v1536
    %v1555 = vand.u32 2147483647, %v1537
    %v1556 = vand.u32 2147483647, %v1538
    %v1557 = vand.u32 2147483647, %v1539
    %v1558 = vand.u32 2147483647, %v1540
    %v1559 = vand.u32 2147483647, %v1541
    %v1560 = vand.u32 2147483647, %v1542
    %v1561 = vand.u32 2147483647, %v1543
    %v1562 = vand.u32 2147483647, %v1544
    %v1563 = vand.u32 2147483647, %v1545
    %v1564 = vand.u32 2147483647, %v1546
    %v1565 = vand.u32 2147483647, %v1547
    %v1566 = vand.u32 2147483647, %v1548
    %v1567 = vand.u32 2147483647, %v1549
    %v1568 = vand.u32 2147483647, %v1550
    %v1569 = vand.u32 2147483647, %v1551
    %v1570 = vand.u32 2147483647, %v1552
    %v1571 = vand.u32 2147483647, %v1553
    %vm1572 = vcmask 146432
    %v1573 = vsel %vm1572, %v1554, 0.0
    %v1574 = vsel %vm1572, %v1557, 0.0
    %v1575 = vadd.f32 %v1573, %v1574
    %v1576 = vsel %vm1572, %v1560, 0.0
    %v1577 = vadd.f32 %v1575, %v1576
    %v1578 = vsel %vm1572, %v1563, 0.0
    %v1579 = vadd.f32 %v1577, %v1578
    %v1580 = vsel %vm1572, %v1566, 0.0
    %v1581 = vadd.f32 %v1579, %v1580
    %v1582 = vsel %vm1572, %v1569, 0.0
    %v1583 = vadd.f32 %v1581, %v1582
    %v1584 = vsel %vm1572, %v1555, 0.0
    %v1585 = vsel %vm1572, %v1558, 0.0
    %v1586 = vadd.f32 %v1584, %v1585
    %v1587 = vsel %vm1572, %v1561, 0.0
    %v1588 = vadd.f32 %v1586, %v1587
    %v1589 = vsel %vm1572, %v1564, 0.0
    %v1590 = vadd.f32 %v1588, %v1589
    %v1591 = vsel %vm1572, %v1567, 0.0
    %v1592 = vadd.f32 %v1590, %v1591
    %v1593 = vsel %vm1572, %v1570, 0.0
    %v1594 = vadd.f32 %v1592, %v1593
    %vm1595 = vcmask 140288
    %v1596 = vsel %vm1595, %v1556, 0.0
    %v1597 = vsel %vm1595, %v1559, 0.0
    %v1598 = vadd.f32 %v1596, %v1597
    %v1599 = vsel %vm1595, %v1562, 0.0
    %v1600 = vadd.f32 %v1598, %v1599
    %v1601 = vsel %vm1595, %v1565, 0.0
    %v1602 = vadd.f32 %v1600, %v1601
    %v1603 = vsel %vm1595, %v1568, 0.0
    %v1604 = vadd.f32 %v1602, %v1603
    %v1605 = vsel %vm1595, %v1571, 0.0
    %v1606 = vadd.f32 %v1604, %v1605
    %s1607 = smul.u32 0, 24
    %s1608 = scalar_lea.vmem [#allocation4], %s1607
    %v1609 = vld [vmem:[%s1608] sm:$0xff]
    %v1610 = vld [vmem:[%s1608 + $0x8] sm:$0xff]
    %v1611 = vld [vmem:[%s1608 + $0x10] sm:$0x3]
    %v1612 = vadd.f32 %v1609, %v1583
    %v1613 = vadd.f32 %v1610, %v1594
    %v1614 = vadd.f32 %v1611, %v1606
    %1615 = vst.msk [vmem:[%s1608] sm:$0xff] %vm1572, %v1612
    %1616 = vst.msk [vmem:[%s1608 + $0x8] sm:$0xff] %vm1572, %v1613
    %1617 = vst.msk [vmem:[%s1608 + $0x10] sm:$0x3] %vm1595, %v1614
    // Predicated region
    $region30: #{tpu_custom_call.1} parent=1 // pred_check
      %p1618 = pneg %p74
    $region31: #{tpu_custom_call.1} parent=1 // pred_check_branch
      %1620 = sbr.rel (%p1618) target = $region33
    $region32: #{tpu_custom_call.1} parent=1 // pred_region
      %v1621 = vld [vmem:[%s1608] sm:$0xff]
      %v1622 = vld [vmem:[%s1608 + $0x8] sm:$0xff]
      %v1623 = vld [vmem:[%s1608 + $0x10] sm:$0x3]
      %v1624 = vsel %vm1572, %v1621, 0.0
      %v1625 = vsel %vm1572, %v1622, 0.0
      %v1626 = vadd.f32 %v1624, %v1625
      %v1627 = vsel %vm1595, %v1623, 0.0
      %v1628 = vadd.f32 %v1626, %v1627
      %1629 = vadd.xlane.f32.xlu0 %v1628
      %v1630 = vpop.xlane.xlu0 %1629
      %v1631 = vrot.slane %v1630, 4
      %v1632 = vadd.f32 %v1630, %v1631
      %v1633 = vrot.slane %v1632, 2
      %v1634 = vadd.f32 %v1632, %v1633
      %v1635 = vrot.slane %v1634, 1
      %v1636 = vadd.f32 %v1634, %v1635
      %s1637 = vtos %v1636
      %v1638 = vstv %s1637
      %1639 = vst [vmem:[#allocation12] sm:$0xff] %v1638
    $region33: #{tpu_custom_call.1} parent=1 // pred_fallthru
      _
    // Predicated region
    $region34: #{tpu_custom_call.1} parent=1 // pred_check
      _
    $region35: #{tpu_custom_call.1} parent=1 // pred_check_branch
      %1641 = sbr.rel (0) target = $region37
    $region36: #{tpu_custom_call.1} parent=1 // pred_region
      %1643 = vsyncadd [#allocation9], 0
      %s1645 = sshll.u32 [#allocation12], 4
      %s1646 = int_to_ptr.vmem [resolvable:$true] %s1645
      %s1647 = sshll.u32 %s4, 4
      %s1648 = int_to_ptr.hbm [resolvable:$true] %s1647
      %1650 = dma.vmem_to_hbm [thread:$0]  %s1646, 128, %s1648, [#allocation9]
    $region37: #{tpu_custom_call.1} parent=1 // pred_fallthru
      _
    // Predicated region
    $region38: #{tpu_custom_call.1} parent=1 // pred_check
      _
    $region39: #{tpu_custom_call.1} parent=1 // pred_check_branch
      %1652 = sbr.rel (0) target = $region41
    $region40: #{tpu_custom_call.1} parent=1 // pred_region
      %1654 = dma.done [#allocation9], 128
    $region41: #{tpu_custom_call.1} parent=1 // pred_fallthru
      _
    %1655 = vsyncpa [#allocation8], 1
    %1656 = vsyncpa [#allocation11], 1
    %1657 = vsyncpa [#allocation9], 1

</llo_original>
